<compile_context>
chip_gen: v7x
topology: tpu7x:2x2x1
jax: 0.10.0
libtpu: 0.0.40
codegen_flags: <defaults>
</compile_context>

<pallas_src>
import math

import jax
import jax.numpy as jnp
from jax.experimental import pallas as pl
from jax.experimental.pallas import tpu as pltpu


def _round_up(n, m):
    return ((n + m - 1) // m) * m


def _target_tiles():
    """>=2 tiles per TensorCore: 4 on dual-TC v7x, 2 on single-TC v5e/v6e."""
    try:
        kind = jax.devices()[0].device_kind.lower()
    except Exception:
        return 2
    return 4 if "v7" in kind else 2


def mlp_forward(x, params, *, max_tile_b=2048):
    """Fused implicit-MLP forward.

    x:      (B, in_features) f32.
    params: [(W_l, b_l)] PyTorch-native: W_l (out_l, in_l) f32, b_l (out_l,) f32.
    Returns (B, out_features) f32 =
        L1-normalize(sigmoid(Linear(...ReLU(Linear(x))...)), dim=-1).
    """
    B, in_features = x.shape
    L = len(params)
    out_features = params[-1][0].shape[0]
    dims = [in_features] + [w.shape[0] for w, _ in params]
    Fp = max(8, _round_up(max(dims), 8))  # padded feature (sublane) width

    # ---- pack all layer weights/biases into two slabs (2 DMAs, grid-invariant,
    #      resident in VMEM across every batch tile). Zero-padding is harmless:
    #      padded rows stay exactly 0 through every Linear+ReLU.
    w_slab = jnp.stack([
        jnp.pad(w.astype(jnp.float32),
                ((0, Fp - w.shape[0]), (0, Fp - w.shape[1])))
        for w, _ in params])                                  # (L, Fp, Fp) f32
    b_slab = jnp.stack([
        jnp.pad(b.astype(jnp.float32), (0, Fp - b.shape[0]))[:, None]
        for _, b in params])                                  # (L, Fp, 1)  f32

    # ---- batch tiling: batch sits on lanes, so tiles are multiples of 128.
    target = _target_tiles()
    Bp = _round_up(B, 128)
    tb = _round_up(pl.cdiv(Bp, target), 128)
    tb = max(128, min(tb, max_tile_b))
    grid = pl.cdiv(Bp, tb)
    Bp = grid * tb

    # Transposed + padded input: (Fp, Bp) -- features on sublanes, batch on lanes.
    xt = jnp.pad(x.T, ((0, Fp - in_features), (0, Bp - B)))

    def kernel(x_ref, w_ref, b_ref, o_ref):
        h = x_ref[...]                                        # (Fp, TB) f32, lane-dense
        for l in range(L - 1):                                # unrolled at trace time
            z = jnp.dot(w_ref[l], h,
                        preferred_element_type=jnp.float32) + b_ref[l]
            h = jnp.maximum(z, 0.0)                           # ReLU (padded rows stay 0)
        z = jnp.dot(w_ref[L - 1], h,
                    preferred_element_type=jnp.float32) + b_ref[L - 1]
        z = z[:out_features, :]                               # drop padded feature rows

        # Numerically stable sigmoid: exp(-|z|) never overflows; the divide is an
        # EUP approximate reciprocal (separate issue slot, nearly free).
        ez = jnp.exp(-jnp.abs(z))
        num = jnp.where(z >= 0.0, 1.0, ez)
        y = num * pl.reciprocal(1.0 + ez, approx=True)        # (out, TB), in (0, 1)

        # F.normalize(y, p=1, dim=feature): sigmoid output is > 0, so no abs needed.
        # Exact divide so each output column sums to exactly 1.
        denom = jnp.maximum(jnp.sum(y, axis=0, keepdims=True), 1e-12)
        o_ref[...] = (y / denom).astype(o_ref.dtype)          # lane-dense full-width store

    out_t = pl.pallas_call(
        kernel,
        out_shape=jax.ShapeDtypeStruct((out_features, Bp), jnp.float32),
        grid_spec=pltpu.PrefetchScalarGridSpec(
            num_scalar_prefetch=0,
            grid=(grid,),
            in_specs=[
                pl.BlockSpec((Fp, tb), lambda i: (0, i)),       # x tile (batch on lanes)
                pl.BlockSpec((L, Fp, Fp), lambda i: (0, 0, 0)),  # weight slab, resident
                pl.BlockSpec((L, Fp, 1), lambda i: (0, 0, 0)),   # bias slab, resident
            ],
            out_specs=pl.BlockSpec((out_features, tb), lambda i: (0, i)),
        ),
        compiler_params=pltpu.CompilerParams(
            # Independent batch tiles: v7x shards them across both TensorCores.
            dimension_semantics=("parallel",)),
    )(xt, w_slab, b_slab)

    return out_t[:, :B].T                                     # back to (B, out_features)


def kaiming_uniform(key, fan_out, fan_in):
    """nn.Linear-style uniform init; PyTorch-native (out, in) weight."""
    bound = 1.0 / math.sqrt(fan_in)
    return jax.random.uniform(key, (fan_out, fan_in), jnp.float32, -bound, bound)


def make_params(key, in_features, out_features, hidden_features=64, hidden_layers=3):
    dims = [in_features, hidden_features // 4, hidden_features]
    dims += [hidden_features] * hidden_layers
    dims += [out_features]
    params = []
    for i in range(len(dims) - 1):
        key, sub = jax.random.split(key)
        w = kaiming_uniform(sub, dims[i + 1], dims[i])        # (out, in) f32
        b = jnp.zeros((dims[i + 1],), jnp.float32)            # nn.init.constant_(bias, 0)
        params.append((w, b))
    return params


if __name__ == "__main__":
    key = jax.random.PRNGKey(0)
    k_x, k_p = jax.random.split(key)

    # Small model dims; batch deliberately NOT a multiple of 128 so the padded-tail
    # path and the multi-tile (>=2) grid are exercised.
    B = 1000
    in_features = 4
    out_features = 16
    hidden_features = 32
    hidden_layers = 3

    x = jax.random.normal(k_x, (B, in_features), jnp.float32)
    params = make_params(k_p, in_features, out_features, hidden_features, hidden_layers)

    out = jax.block_until_ready(mlp_forward(x, params))

    # Plain-JAX f32 reference of the same forward pass.
    def ref(x, params):
        h = x
        for w, b in params[:-1]:
            h = jnp.maximum(h @ w.T + b, 0.0)
        w, b = params[-1]
        z = h @ w.T + b
        y = jax.nn.sigmoid(z)
        return y / jnp.maximum(jnp.sum(jnp.abs(y), -1, keepdims=True), 1e-12)

    ref_out = ref(x, params)
    assert out.shape == (B, out_features)
    max_err = float(jnp.max(jnp.abs(out - ref_out)))
    # Tolerance covers the EUP approximate reciprocal inside the sigmoid.
    assert jnp.allclose(out, ref_out, atol=2e-3, rtol=2e-2), max_err

    print("KERNEL_OK")
</pallas_src>

<mosaic_0001>
module attributes {stable_mosaic.version = 11 : i64} {
  func.func @kernel(%arg0: i32, %arg1: memref<32x512xf32, #tpu.memory_space<vmem>>, %arg2: memref<6x32x32xf32, #tpu.memory_space<vmem>>, %arg3: memref<6x32x1xf32, #tpu.memory_space<vmem>>, %arg4: memref<16x512xf32, #tpu.memory_space<vmem>>) attributes {dimension_semantics = [#tpu.dimension_semantics<parallel>], iteration_bounds = array<i64: 2>, scalar_prefetch = 0 : i64, scratch_operands = 0 : i64, tpu.core_type = #tpu.core_type<tc>, window_params = [{transform_indices = @transform_0, window_bounds = array<i64: 32, 512>}, {pipeline_mode = #tpu.pipeline_mode<synchronous>, transform_indices = @transform_1, window_bounds = array<i64: 6, 32, 32>}, {pipeline_mode = #tpu.pipeline_mode<synchronous>, transform_indices = @transform_2, window_bounds = array<i64: 6, 32, 1>}, {transform_indices = @transform_3, window_bounds = array<i64: 16, 512>}]} {
    %c0 = arith.constant 0 : index
    %c0_0 = arith.constant 0 : index
    %0 = vector.load %arg1[%c0, %c0_0] : memref<32x512xf32, #tpu.memory_space<vmem>>, vector<32x512xf32>
    %c0_1 = arith.constant 0 : index
    %c0_2 = arith.constant 0 : index
    %c0_3 = arith.constant 0 : index
    %1 = vector.load %arg2[%c0_1, %c0_2, %c0_3] : memref<6x32x32xf32, #tpu.memory_space<vmem>>, vector<1x32x32xf32>
    %2 = vector.shape_cast %1 : vector<1x32x32xf32> to vector<32x32xf32>
    %cst = arith.constant dense<0.000000e+00> : vector<32x512xf32>
    %3 = tpu.matmul %2, %0, %cst {dimension_numbers = #tpu.dot_dimension_numbers<[1], [0], [0], [1], [0, 0, 1, 1], [], []>} : vector<32x32xf32>, vector<32x512xf32>, vector<32x512xf32> -> vector<32x512xf32>
    %c0_4 = arith.constant 0 : index
    %c0_5 = arith.constant 0 : index
    %c0_6 = arith.constant 0 : index
    %4 = vector.load %arg3[%c0_4, %c0_5, %c0_6] : memref<6x32x1xf32, #tpu.memory_space<vmem>>, vector<1x32x1xf32>
    %5 = vector.shape_cast %4 : vector<1x32x1xf32> to vector<32x1xf32>
    %6 = vector.broadcast %5 : vector<32x1xf32> to vector<32x512xf32>
    %7 = arith.addf %3, %6 : vector<32x512xf32>
    %cst_7 = arith.constant 0.000000e+00 : f32
    %8 = vector.broadcast %cst_7 : f32 to vector<32x512xf32>
    %9 = arith.maximumf %7, %8 : vector<32x512xf32>
    %c1 = arith.constant 1 : index
    %c0_8 = arith.constant 0 : index
    %c0_9 = arith.constant 0 : index
    %10 = vector.load %arg2[%c1, %c0_8, %c0_9] : memref<6x32x32xf32, #tpu.memory_space<vmem>>, vector<1x32x32xf32>
    %11 = vector.shape_cast %10 : vector<1x32x32xf32> to vector<32x32xf32>
    %cst_10 = arith.constant dense<0.000000e+00> : vector<32x512xf32>
    %12 = tpu.matmul %11, %9, %cst_10 {dimension_numbers = #tpu.dot_dimension_numbers<[1], [0], [0], [1], [0, 0, 1, 1], [], []>} : vector<32x32xf32>, vector<32x512xf32>, vector<32x512xf32> -> vector<32x512xf32>
    %c1_11 = arith.constant 1 : index
    %c0_12 = arith.constant 0 : index
    %c0_13 = arith.constant 0 : index
    %13 = vector.load %arg3[%c1_11, %c0_12, %c0_13] : memref<6x32x1xf32, #tpu.memory_space<vmem>>, vector<1x32x1xf32>
    %14 = vector.shape_cast %13 : vector<1x32x1xf32> to vector<32x1xf32>
    %15 = vector.broadcast %14 : vector<32x1xf32> to vector<32x512xf32>
    %16 = arith.addf %12, %15 : vector<32x512xf32>
    %cst_14 = arith.constant 0.000000e+00 : f32
    %17 = vector.broadcast %cst_14 : f32 to vector<32x512xf32>
    %18 = arith.maximumf %16, %17 : vector<32x512xf32>
    %c2 = arith.constant 2 : index
    %c0_15 = arith.constant 0 : index
    %c0_16 = arith.constant 0 : index
    %19 = vector.load %arg2[%c2, %c0_15, %c0_16] : memref<6x32x32xf32, #tpu.memory_space<vmem>>, vector<1x32x32xf32>
    %20 = vector.shape_cast %19 : vector<1x32x32xf32> to vector<32x32xf32>
    %cst_17 = arith.constant dense<0.000000e+00> : vector<32x512xf32>
    %21 = tpu.matmul %20, %18, %cst_17 {dimension_numbers = #tpu.dot_dimension_numbers<[1], [0], [0], [1], [0, 0, 1, 1], [], []>} : vector<32x32xf32>, vector<32x512xf32>, vector<32x512xf32> -> vector<32x512xf32>
    %c2_18 = arith.constant 2 : index
    %c0_19 = arith.constant 0 : index
    %c0_20 = arith.constant 0 : index
    %22 = vector.load %arg3[%c2_18, %c0_19, %c0_20] : memref<6x32x1xf32, #tpu.memory_space<vmem>>, vector<1x32x1xf32>
    %23 = vector.shape_cast %22 : vector<1x32x1xf32> to vector<32x1xf32>
    %24 = vector.broadcast %23 : vector<32x1xf32> to vector<32x512xf32>
    %25 = arith.addf %21, %24 : vector<32x512xf32>
    %cst_21 = arith.constant 0.000000e+00 : f32
    %26 = vector.broadcast %cst_21 : f32 to vector<32x512xf32>
    %27 = arith.maximumf %25, %26 : vector<32x512xf32>
    %c3 = arith.constant 3 : index
    %c0_22 = arith.constant 0 : index
    %c0_23 = arith.constant 0 : index
    %28 = vector.load %arg2[%c3, %c0_22, %c0_23] : memref<6x32x32xf32, #tpu.memory_space<vmem>>, vector<1x32x32xf32>
    %29 = vector.shape_cast %28 : vector<1x32x32xf32> to vector<32x32xf32>
    %cst_24 = arith.constant dense<0.000000e+00> : vector<32x512xf32>
    %30 = tpu.matmul %29, %27, %cst_24 {dimension_numbers = #tpu.dot_dimension_numbers<[1], [0], [0], [1], [0, 0, 1, 1], [], []>} : vector<32x32xf32>, vector<32x512xf32>, vector<32x512xf32> -> vector<32x512xf32>
    %c3_25 = arith.constant 3 : index
    %c0_26 = arith.constant 0 : index
    %c0_27 = arith.constant 0 : index
    %31 = vector.load %arg3[%c3_25, %c0_26, %c0_27] : memref<6x32x1xf32, #tpu.memory_space<vmem>>, vector<1x32x1xf32>
    %32 = vector.shape_cast %31 : vector<1x32x1xf32> to vector<32x1xf32>
    %33 = vector.broadcast %32 : vector<32x1xf32> to vector<32x512xf32>
    %34 = arith.addf %30, %33 : vector<32x512xf32>
    %cst_28 = arith.constant 0.000000e+00 : f32
    %35 = vector.broadcast %cst_28 : f32 to vector<32x512xf32>
    %36 = arith.maximumf %34, %35 : vector<32x512xf32>
    %c4 = arith.constant 4 : index
    %c0_29 = arith.constant 0 : index
    %c0_30 = arith.constant 0 : index
    %37 = vector.load %arg2[%c4, %c0_29, %c0_30] : memref<6x32x32xf32, #tpu.memory_space<vmem>>, vector<1x32x32xf32>
    %38 = vector.shape_cast %37 : vector<1x32x32xf32> to vector<32x32xf32>
    %cst_31 = arith.constant dense<0.000000e+00> : vector<32x512xf32>
    %39 = tpu.matmul %38, %36, %cst_31 {dimension_numbers = #tpu.dot_dimension_numbers<[1], [0], [0], [1], [0, 0, 1, 1], [], []>} : vector<32x32xf32>, vector<32x512xf32>, vector<32x512xf32> -> vector<32x512xf32>
    %c4_32 = arith.constant 4 : index
    %c0_33 = arith.constant 0 : index
    %c0_34 = arith.constant 0 : index
    %40 = vector.load %arg3[%c4_32, %c0_33, %c0_34] : memref<6x32x1xf32, #tpu.memory_space<vmem>>, vector<1x32x1xf32>
    %41 = vector.shape_cast %40 : vector<1x32x1xf32> to vector<32x1xf32>
    %42 = vector.broadcast %41 : vector<32x1xf32> to vector<32x512xf32>
    %43 = arith.addf %39, %42 : vector<32x512xf32>
    %cst_35 = arith.constant 0.000000e+00 : f32
    %44 = vector.broadcast %cst_35 : f32 to vector<32x512xf32>
    %45 = arith.maximumf %43, %44 : vector<32x512xf32>
    %c5 = arith.constant 5 : index
    %c0_36 = arith.constant 0 : index
    %c0_37 = arith.constant 0 : index
    %46 = vector.load %arg2[%c5, %c0_36, %c0_37] : memref<6x32x32xf32, #tpu.memory_space<vmem>>, vector<1x32x32xf32>
    %47 = vector.shape_cast %46 : vector<1x32x32xf32> to vector<32x32xf32>
    %cst_38 = arith.constant dense<0.000000e+00> : vector<32x512xf32>
    %48 = tpu.matmul %47, %45, %cst_38 {dimension_numbers = #tpu.dot_dimension_numbers<[1], [0], [0], [1], [0, 0, 1, 1], [], []>} : vector<32x32xf32>, vector<32x512xf32>, vector<32x512xf32> -> vector<32x512xf32>
    %c5_39 = arith.constant 5 : index
    %c0_40 = arith.constant 0 : index
    %c0_41 = arith.constant 0 : index
    %49 = vector.load %arg3[%c5_39, %c0_40, %c0_41] : memref<6x32x1xf32, #tpu.memory_space<vmem>>, vector<1x32x1xf32>
    %50 = vector.shape_cast %49 : vector<1x32x1xf32> to vector<32x1xf32>
    %51 = vector.broadcast %50 : vector<32x1xf32> to vector<32x512xf32>
    %52 = arith.addf %48, %51 : vector<32x512xf32>
    %53 = vector.extract_strided_slice %52 {offsets = [0, 0], sizes = [16, 512], strides = [1, 1]} : vector<32x512xf32> to vector<16x512xf32>
    %54 = math.absf %53 : vector<16x512xf32>
    %cst_42 = arith.constant 0.000000e+00 : f32
    %55 = vector.broadcast %cst_42 : f32 to vector<16x512xf32>
    %56 = arith.subf %55, %54 : vector<16x512xf32>
    %57 = math.exp %56 : vector<16x512xf32>
    %cst_43 = arith.constant 0.000000e+00 : f32
    %58 = vector.broadcast %cst_43 : f32 to vector<16x512xf32>
    %59 = arith.cmpf oge, %53, %58 : vector<16x512xf32>
    %cst_44 = arith.constant 1.000000e+00 : f32
    %60 = vector.broadcast %cst_44 : f32 to vector<16x512xf32>
    %61 = arith.select %59, %60, %57 : vector<16x512xi1>, vector<16x512xf32>
    %cst_45 = arith.constant 1.000000e+00 : f32
    %62 = vector.broadcast %cst_45 : f32 to vector<16x512xf32>
    %63 = arith.addf %62, %57 : vector<16x512xf32>
    %64 = tpu.reciprocal %63 {approx = true} : vector<16x512xf32> -> vector<16x512xf32>
    %65 = arith.mulf %61, %64 : vector<16x512xf32>
    %cst_46 = arith.constant dense<0.000000e+00> : vector<512xf32>
    %66 = vector.multi_reduction <add>, %65, %cst_46 [0] : vector<16x512xf32> to vector<512xf32>
    %67 = vector.shape_cast %66 : vector<512xf32> to vector<1x512xf32>
    %cst_47 = arith.constant 9.99999996E-13 : f32
    %68 = vector.broadcast %cst_47 : f32 to vector<1x512xf32>
    %69 = arith.maximumf %67, %68 : vector<1x512xf32>
    %70 = vector.broadcast %69 : vector<1x512xf32> to vector<16x512xf32>
    %71 = arith.divf %65, %70 : vector<16x512xf32>
    %c0_48 = arith.constant 0 : index
    %c0_49 = arith.constant 0 : index
    %72 = vector.load %arg4[%c0_48, %c0_49] : memref<16x512xf32, #tpu.memory_space<vmem>>, vector<16x512xf32>
    tpu.vector_store %arg4[%c0_48, %c0_49], %71 {strides = array<i32>} : memref<16x512xf32, #tpu.memory_space<vmem>>, vector<16x512xf32>,
    return
  }
  func.func @transform_0(%arg0: i32) -> (i32, i32) {
    %c0_i32 = arith.constant 0 : i32
    %c0_i32_0 = arith.constant 0 : i32
    return %c0_i32, %arg0 : i32, i32
  }
  func.func @transform_1(%arg0: i32) -> (i32, i32, i32) {
    %c0_i32 = arith.constant 0 : i32
    %c0_i32_0 = arith.constant 0 : i32
    %c0_i32_1 = arith.constant 0 : i32
    %c0_i32_2 = arith.constant 0 : i32
    return %c0_i32, %c0_i32_0, %c0_i32_1 : i32, i32, i32
  }
  func.func @transform_2(%arg0: i32) -> (i32, i32, i32) {
    %c0_i32 = arith.constant 0 : i32
    %c0_i32_0 = arith.constant 0 : i32
    %c0_i32_1 = arith.constant 0 : i32
    %c0_i32_2 = arith.constant 0 : i32
    return %c0_i32, %c0_i32_0, %c0_i32_1 : i32, i32, i32
  }
  func.func @transform_3(%arg0: i32) -> (i32, i32) {
    %c0_i32 = arith.constant 0 : i32
    %c0_i32_0 = arith.constant 0 : i32
    return %c0_i32, %arg0 : i32, i32
  }
}

</mosaic_0001>

<llo_original>
// kernel: tpu_custom_call.1
$region0: #{tpu_custom_call.1}
  #allocation0 [shape = 'u32[]', space=smem, size = 0x4, offset = 0x4, fixed_abs, tag = 'smem constant byte address 0x4 - core index']
  #allocation1 [shape = 'u32[144,128]{1,0:T(1,128)}', space=vmem, size = 0x12000, scoped, tag = 'internal scratch']
  %s0 = inlined_call_operand.hbm [shape: f32[32,1024], index: 0, kind: input, shape index: {}]
  %s1 = inlined_call_operand.vmem [shape: f32[6,32,32], index: 1, kind: input, shape index: {}]
  %s2 = inlined_call_operand.vmem [shape: f32[6,32,1], index: 2, kind: input, shape index: {}]
  %s3 = inlined_call_operand.hbm [shape: f32[16,1024], index: 3, kind: output, shape index: {}]
  %s4 = sld [smem:[#allocation0]]
  $region49: #{tpu_custom_call.1} parent=0
    _
  %s6 = ssub.s32 1, %s4
  %s7 = scalar_select 0, %s6, %s4
  $region1: #{tpu_custom_call.1} parent=0
    #allocation2 [shape = 'u8[131072]{0}', space=vmem, size = 0x20000, scoped, tag = 'input window, operand 0']
    #allocation3 [shape = 's32[2]{0}', space=sflag, size = 0x8, scoped, tag = 'scoped memory for tpu_custom_call.1']
    #allocation4 [shape = 's32[2]{0}', space=sflag, size = 0x8, scoped, tag = 'scoped memory for tpu_custom_call.1']
    #allocation5 [shape = 'u8[65536]{0}', space=vmem, size = 0x10000, scoped, tag = 'output window, operand 0']
    %8 = vsyncpa [#allocation3], 0
    %s9 = scalar_lea.sflag [#allocation3], 1
    %10 = vsyncpa %s9, 0
    %11 = vsyncpa [#allocation4], 0
    %s12 = scalar_lea.sflag [#allocation4], 1
    %13 = vsyncpa %s12, 0
    loop: start=0, step=1, limit=4
    $region2: #{tpu_custom_call.1} parent=1 // loop_pre_header
      _
    $region3: #{tpu_custom_call.1} parent=1 // loop_header
      %s15 = sphi 0, %s19
      %p16 = scmp.ge.s32.totalorder %s15, 4
      %s25 = sphi 0, %s27
      %s28 = sphi 0, %s25
      %s29 = sphi 0, %s28
      %s45 = sphi 0, %s29
      %s49 = sphi 0, %s49
      %s51 = sphi 0, %s49
      %s52 = sphi 0, %s51
      %s66 = sphi 0, %s52
      %s70 = sphi 0, %s70
      %s72 = sphi 0, %s70
      %s73 = sphi 0, %s72
      %s87 = sphi 0, %s73
      %s93 = sphi 0, %s95
      %s96 = sphi 0, %s93
      %s97 = sphi 0, %s96
      %s113 = sphi 0, %s97
    $region4: #{tpu_custom_call.1} parent=1 // loop_header_branch
      %18 = sbr.rel (%p16) target = $region8
    $region5: #{tpu_custom_call.1} parent=1 // loop_body
      %s20 = ssub.s32 %s15, 1
      %s21 = ssub.s32 %s15, 2
      %s22 = sadd.s32 %s15, 1
      %s23 = ssub.s32 %s15, %s22
      %p24 = scmp.eq.s32.totalorder %s23, 0
      %s26 = sadd.s32 %s25, 1
      %s27 = scalar_select %p24, %s25, %s26
      %p30 = pneg %p24
      %p31 = scmp.eq.s32.totalorder %s15, 1
      %p32 = por %p30, %p31
      %p33 = scmp.ne.s32.totalorder %s25, %s28
      %p34 = scmp.eq.s32.totalorder %s15, 0
      %p35 = por %p33, %p34
      %p36 = scmp.ne.s32.totalorder %s25, %s28
      %p37 = scmp.eq.s32.totalorder %s20, 1
      %p38 = por %p36, %p37
      %p39 = scmp.ne.s32.totalorder %s28, %s29
      %p40 = scmp.eq.s32.totalorder %s20, 0
      %p41 = por %p39, %p40
      %p42 = scmp.ne.s32.totalorder %s28, %s29
      %p43 = scmp.eq.s32.totalorder %s21, 1
      %p44 = por %p42, %p43
      %p46 = scmp.ne.s32.totalorder %s29, %s45
      %p47 = scmp.eq.s32.totalorder %s21, 0
      %p48 = por %p46, %p47
      %s50 = sadd.s32 %s49, 1
      %p53 = scmp.eq.s32.totalorder %s15, 1
      %p54 = scmp.ne.s32.totalorder %s49, %s51
      %p55 = scmp.eq.s32.totalorder %s15, 0
      %p56 = por %p54, %p55
      %p57 = scmp.ne.s32.totalorder %s49, %s51
      %p58 = scmp.eq.s32.totalorder %s20, 1
      %p59 = por %p57, %p58
      %p60 = scmp.ne.s32.totalorder %s51, %s52
      %p61 = scmp.eq.s32.totalorder %s20, 0
      %p62 = por %p60, %p61
      %p63 = scmp.ne.s32.totalorder %s51, %s52
      %p64 = scmp.eq.s32.totalorder %s21, 1
      %p65 = por %p63, %p64
      %p67 = scmp.ne.s32.totalorder %s52, %s66
      %p68 = scmp.eq.s32.totalorder %s21, 0
      %p69 = por %p67, %p68
      %s71 = sadd.s32 %s70, 1
      %p74 = scmp.eq.s32.totalorder %s15, 1
      %p75 = scmp.ne.s32.totalorder %s70, %s72
      %p76 = scmp.eq.s32.totalorder %s15, 0
      %p77 = por %p75, %p76
      %p78 = scmp.ne.s32.totalorder %s70, %s72
      %p79 = scmp.eq.s32.totalorder %s20, 1
      %p80 = por %p78, %p79
      %p81 = scmp.ne.s32.totalorder %s72, %s73
      %p82 = scmp.eq.s32.totalorder %s20, 0
      %p83 = por %p81, %p82
      %p84 = scmp.ne.s32.totalorder %s72, %s73
      %p85 = scmp.eq.s32.totalorder %s21, 1
      %p86 = por %p84, %p85
      %p88 = scmp.ne.s32.totalorder %s73, %s87
      %p89 = scmp.eq.s32.totalorder %s21, 0
      %p90 = por %p88, %p89
      %s91 = ssub.s32 %s15, %s22
      %p92 = scmp.eq.s32.totalorder %s91, 0
      %s94 = sadd.s32 %s93, 1
      %s95 = scalar_select %p92, %s93, %s94
      %p98 = pneg %p92
      %p99 = scmp.eq.s32.totalorder %s15, 1
      %p100 = por %p98, %p99
      %p101 = scmp.ne.s32.totalorder %s93, %s96
      %p102 = scmp.eq.s32.totalorder %s15, 0
      %p103 = por %p101, %p102
      %p104 = scmp.ne.s32.totalorder %s93, %s96
      %p105 = scmp.eq.s32.totalorder %s20, 1
      %p106 = por %p104, %p105
      %p107 = scmp.ne.s32.totalorder %s96, %s97
      %p108 = scmp.eq.s32.totalorder %s20, 0
      %p109 = por %p107, %p108
      %p110 = scmp.ne.s32.totalorder %s96, %s97
      %p111 = scmp.eq.s32.totalorder %s21, 1
      %p112 = por %p110, %p111
      %p114 = scmp.ne.s32.totalorder %s97, %s113
      %p115 = scmp.eq.s32.totalorder %s21, 0
      %p116 = por %p114, %p115
      %p117 = scmp.le.s32.totalorder 1, %s15
      %p118 = scmp.lt.s32.totalorder %s15, 3
      %p119 = pnand %p117, %p118
      %p120 = pneg %p119
      // Predicated region
      $region9: #{tpu_custom_call.1} parent=5 // pred_check
        _
      $region10: #{tpu_custom_call.1} parent=5 // pred_check_branch
        %122 = sbr.rel (%p119) target = $region12
      $region11: #{tpu_custom_call.1} parent=5 // pred_region
        %s123 = ssub.s32 %s15, 1
        // Predicated region
        $region13: #{tpu_custom_call.1} parent=11 // pred_check
          %p124 = pneg %p62
        $region14: #{tpu_custom_call.1} parent=11 // pred_check_branch
          %126 = sbr.rel (%p124) target = $region16
        $region15: #{tpu_custom_call.1} parent=11 // pred_region
          _
        $region16: #{tpu_custom_call.1} parent=11 // pred_fallthru
          _
        // Predicated region
        $region17: #{tpu_custom_call.1} parent=11 // pred_check
          %p127 = pneg %p83
        $region18: #{tpu_custom_call.1} parent=11 // pred_check_branch
          %129 = sbr.rel (%p127) target = $region20
        $region19: #{tpu_custom_call.1} parent=11 // pred_region
          _
        $region20: #{tpu_custom_call.1} parent=11 // pred_fallthru
          _
      $region12: #{tpu_custom_call.1} parent=5 // pred_fallthru
        _
      %p130 = scmp.lt.s32.totalorder %s15, 2
      // Predicated region
      $region21: #{tpu_custom_call.1} parent=5 // pred_check
        %p131 = pneg %p130
      $region22: #{tpu_custom_call.1} parent=5 // pred_check_branch
        %133 = sbr.rel (%p131) target = $region24
      $region23: #{tpu_custom_call.1} parent=5 // pred_region
        // Predicated region
        $region25: #{tpu_custom_call.1} parent=23 // pred_check
          %p134 = pneg %p35
        $region26: #{tpu_custom_call.1} parent=23 // pred_check_branch
          %136 = sbr.rel (%p134) target = $region28
        $region27: #{tpu_custom_call.1} parent=23 // pred_region
          %s137 = sand.u32 %s25, 1
          %s138 = scalar_lea.sflag [#allocation3], %s137
          %s139 = sand.u32 %s25, 1
          %s140 = smul.addr %s139, 128
          %s141 = scalar_lea.vmem [#allocation2], %s140
          %s142 = smul.u32 4, %s15
          %s144 = ssub.s32 2048, 2048
          %145 = vsyncadd %s138, %s144
          %s146 = smul.addr %s142, 128
          %s147 = scalar_lea.hbm %s0, %s146
          %s148 = sshll.u32 %s141, 4
          %s149 = int_to_ptr.vmem [resolvable:$true] %s148
          %154 = dma.hbm_to_vmem [thread:$0]  %s147, 2048, %s149, %s138, 1024, 512, 32
        $region28: #{tpu_custom_call.1} parent=23 // pred_fallthru
          _
      $region24: #{tpu_custom_call.1} parent=5 // pred_fallthru
        _
      %p155 = scmp.le.s32.totalorder 1, %s15
      %p156 = scmp.lt.s32.totalorder %s15, 3
      %p157 = pnand %p155, %p156
      %p158 = pneg %p157
      // Predicated region
      $region29: #{tpu_custom_call.1} parent=5 // pred_check
        _
      $region30: #{tpu_custom_call.1} parent=5 // pred_check_branch
        %160 = sbr.rel (%p157) target = $region32
      $region31: #{tpu_custom_call.1} parent=5 // pred_region
        %s161 = ssub.s32 %s15, 1
        %s162 = sand.u32 %s28, 1
        %s163 = scalar_lea.sflag [#allocation3], %s162
        %s164 = sand.u32 %s28, 1
        %s165 = smul.addr %s164, 128
        %s166 = scalar_lea.vmem [#allocation2], %s165
        // Predicated region
        $region33: #{tpu_custom_call.1} parent=31 // pred_check
          %p167 = pneg %p41
        $region34: #{tpu_custom_call.1} parent=31 // pred_check_branch
          %169 = sbr.rel (%p167) target = $region36
        $region35: #{tpu_custom_call.1} parent=31 // pred_region
          %170 = dma.done %s163, 2048
        $region36: #{tpu_custom_call.1} parent=31 // pred_fallthru
          _
        %s171 = sand.u32 %s28, 1
        %s172 = scalar_lea.sflag [#allocation3], %s171
        %s173 = sand.u32 %s28, 1
        %s174 = smul.addr %s173, 128
        %s175 = scalar_lea.vmem [#allocation2], %s174
        %p176 = pneg %p41
        %p177 = pneg %p38
        %p178 = pneg %p62
        %p179 = pneg %p59
        %p180 = pneg %p83
        %p181 = pneg %p80
        %p182 = pneg %p109
        %p183 = pneg %p106
        %s184 = sand.u32 %s96, 1
        %s185 = scalar_lea.sflag [#allocation4], %s184
        %s186 = sand.u32 %s96, 1
        %s187 = smul.addr %s186, 64
        %s188 = scalar_lea.vmem [#allocation5], %s187
        %s189 = smul.u32 4, %s20
        %s190 = smul.u32 4, %s20
        %v191 = vld [vmem:[%s166] sm:$0xff]
        %v192 = vld [vmem:[%s166 + $0x8] sm:$0xff]
        %v193 = vld [vmem:[%s166 + $0x10] sm:$0xff]
        %v194 = vld [vmem:[%s166 + $0x18] sm:$0xff]
        %v195 = vld [vmem:[%s166 + $0x20] sm:$0xff]
        %v196 = vld [vmem:[%s166 + $0x28] sm:$0xff]
        %v197 = vld [vmem:[%s166 + $0x30] sm:$0xff]
        %v198 = vld [vmem:[%s166 + $0x38] sm:$0xff]
        %v199 = vld [vmem:[%s166 + $0x40] sm:$0xff]
        %v200 = vld [vmem:[%s166 + $0x48] sm:$0xff]
        %v201 = vld [vmem:[%s166 + $0x50] sm:$0xff]
        %v202 = vld [vmem:[%s166 + $0x58] sm:$0xff]
        %v203 = vld [vmem:[%s166 + $0x60] sm:$0xff]
        %v204 = vld [vmem:[%s166 + $0x68] sm:$0xff]
        %v205 = vld [vmem:[%s166 + $0x70] sm:$0xff]
        %v206 = vld [vmem:[%s166 + $0x78] sm:$0xff]
        %v207 = vld [vmem:[%s1] sm:$0xff]
        %v208 = vld [vmem:[%s1 + $0x8] sm:$0xff]
        %v209 = vld [vmem:[%s1 + $0x10] sm:$0xff]
        %v210 = vld [vmem:[%s1 + $0x18] sm:$0xff]
        %v211 = vld [vmem:[%s2] sm:$0xff]
        %v212 = vld [vmem:[%s2 + $0x8] sm:$0xff]
        %v213 = vld [vmem:[%s2 + $0x10] sm:$0xff]
        %v214 = vld [vmem:[%s2 + $0x18] sm:$0xff]
        %216 = vset.pattern.permute.xlu0 0
        %217 = vperm.xlu0 %216, %v211
        %v218 = vpop.permute.xlu0 %217
        %221 = vset.pattern.permute.xlu0 0
        %222 = vperm.xlu0 %221, %v212
        %v223 = vpop.permute.xlu0 %222
        %226 = vset.pattern.permute.xlu0 0
        %227 = vperm.xlu0 %226, %v213
        %v228 = vpop.permute.xlu0 %227
        %231 = vset.pattern.permute.xlu0 0
        %232 = vperm.xlu0 %231, %v214
        %v233 = vpop.permute.xlu0 %232
        %vm235 = vcmask 261120
        %v237 = vsel %vm235, %v207, 0
        %v240 = vsel %vm235, %v208, 0
        %v243 = vsel %vm235, %v209, 0
        %v246 = vsel %vm235, %v210, 0
        %248 = vmatprep.subr.mxu0 %v192
        %249 = vmatpush1.msra.mxu0 %v191
        %250 = vmatprep.subr.mxu0 %v196
        %251 = vmatpush1.msra.mxu0 %v195
        %252 = vmatprep.subr.mxu0 %v200
        %253 = vmatpush1.msra.mxu0 %v199
        %254 = vmatprep.subr.mxu0 %v204
        %255 = vmatpush1.msra.mxu0 %v203
        %256 = vmatprep.subr.mxu0 0.0
        %257 = vmatpush1.msra.mxu0 0.0
        %258 = vmatprep.subr.mxu0 0.0
        %259 = vmatpush1.msra.mxu0 0.0
        %260 = vmatprep.subr.mxu0 0.0
        %261 = vmatpush1.msra.mxu0 0.0
        %262 = vmatprep.subr.mxu0 0.0
        %263 = vmatpush1.msra.mxu0 0.0
        %264 = vmatprep.subr.mxu0 0.0
        %265 = vmatpush1.msra.mxu0 0.0
        %266 = vmatprep.subr.mxu0 0.0
        %267 = vmatpush1.msra.mxu0 0.0
        %268 = vmatprep.subr.mxu0 0.0
        %269 = vmatpush1.msra.mxu0 0.0
        %270 = vmatprep.subr.mxu0 0.0
        %271 = vmatpush1.msra.mxu0 0.0
        %272 = vmatprep.subr.mxu0 0.0
        %273 = vmatpush1.msra.mxu0 0.0
        %274 = vmatprep.subr.mxu0 0.0
        %275 = vmatpush1.msra.mxu0 0.0
        %276 = vmatprep.subr.mxu0 0.0
        %277 = vmatpush1.msra.mxu0 0.0
        %278 = vmatprep.subr.mxu0 0.0
        %279 = vmatpush1.msra.mxu0 0.0
        %280 = vmatprep.subr.mxu0 0.0
        %281 = vmatpush1.msra.mxu0 0.0
        %282 = vmatprep.subr.mxu0 0.0
        %283 = vmatpush1.msra.mxu0 0.0
        %284 = vmatprep.subr.mxu0 0.0
        %285 = vmatpush1.msra.mxu0 0.0
        %286 = vmatprep.subr.mxu0 0.0
        %287 = vmatpush1.msra.mxu0 0.0
        %288 = vmatprep.subr.mxu0 0.0
        %289 = vmatpush1.msra.mxu0 0.0
        %290 = vmatprep.subr.mxu0 0.0
        %291 = vmatpush1.msra.mxu0 0.0
        %292 = vmatprep.subr.mxu0 0.0
        %293 = vmatpush1.msra.mxu0 0.0
        %294 = vmatprep.subr.mxu0 0.0
        %295 = vmatpush1.msra.mxu0 0.0
        %296 = vmatprep.subr.mxu0 0.0
        %297 = vmatpush1.msra.mxu0 0.0
        %298 = vmatprep.subr.mxu0 0.0
        %299 = vmatpush1.msra.mxu0 0.0
        %300 = vmatprep.subr.mxu0 0.0
        %301 = vmatpush1.msra.mxu0 0.0
        %302 = vmatprep.subr.mxu0 0.0
        %303 = vmatpush1.msra.mxu0 0.0
        %304 = vmatprep.subr.mxu0 0.0
        %305 = vmatpush1.msra.mxu0 0.0
        %306 = vmatprep.subr.mxu0 0.0
        %307 = vmatpush1.msra.mxu0 0.0
        %308 = vmatprep.subr.mxu0 0.0
        %309 = vmatpush1.msra.mxu0 0.0
        %310 = vmatprep.subr.mxu0 0.0
        %311 = vmatpush1.msra.mxu0 0.0
        %312 = vmatprep.mubr.f32.mxu0 0.0
        %313 = vmatmul.mubr.f32.gmra.mrb[0].mxu0 %v237
        %v314 = vpop.f32.mrb[0].mxu0
        %v315 = vadd.f32 %v218, %v314
        %v316 = vpop.f32.mrb[0].mxu0
        %v317 = vadd.f32 %v218, %v316
        %318 = vmatprep.mubr.f32.mxu0 0.0
        %319 = vmatmul.mubr.f32.gmra.mrb[0].mxu0 %v240
        %v320 = vpop.f32.mrb[0].mxu0
        %v321 = vadd.f32 %v223, %v320
        %v322 = vpop.f32.mrb[0].mxu0
        %v323 = vadd.f32 %v223, %v322
        %324 = vmatprep.mubr.f32.mxu0 0.0
        %325 = vmatmul.mubr.f32.gmra.mrb[0].mxu0 %v243
        %v326 = vpop.f32.mrb[0].mxu0
        %v327 = vadd.f32 %v228, %v326
        %v328 = vpop.f32.mrb[0].mxu0
        %v329 = vadd.f32 %v228, %v328
        %330 = vmatprep.mubr.f32.mxu0 0.0
        %331 = vmatmul.mubr.f32.gmra.mrb[0].mxu0 %v246
        %v332 = vpop.f32.mrb[0].mxu0
        %v333 = vadd.f32 %v233, %v332
        %v334 = vpop.f32.mrb[0].mxu0
        %v335 = vadd.f32 %v233, %v334
        %336 = vdwg.mxu0
        %337 = vmatprep.subr.mxu0 %v194
        %338 = vmatpush1.msra.mxu0 %v193
        %339 = vmatprep.subr.mxu0 %v198
        %340 = vmatpush1.msra.mxu0 %v197
        %341 = vmatprep.subr.mxu0 %v202
        %342 = vmatpush1.msra.mxu0 %v201
        %343 = vmatprep.subr.mxu0 %v206
        %344 = vmatpush1.msra.mxu0 %v205
        %345 = vmatprep.subr.mxu0 0.0
        %346 = vmatpush1.msra.mxu0 0.0
        %347 = vmatprep.subr.mxu0 0.0
        %348 = vmatpush1.msra.mxu0 0.0
        %349 = vmatprep.subr.mxu0 0.0
        %350 = vmatpush1.msra.mxu0 0.0
        %351 = vmatprep.subr.mxu0 0.0
        %352 = vmatpush1.msra.mxu0 0.0
        %353 = vmatprep.subr.mxu0 0.0
        %354 = vmatpush1.msra.mxu0 0.0
        %355 = vmatprep.subr.mxu0 0.0
        %356 = vmatpush1.msra.mxu0 0.0
        %357 = vmatprep.subr.mxu0 0.0
        %358 = vmatpush1.msra.mxu0 0.0
        %359 = vmatprep.subr.mxu0 0.0
        %360 = vmatpush1.msra.mxu0 0.0
        %361 = vmatprep.subr.mxu0 0.0
        %362 = vmatpush1.msra.mxu0 0.0
        %363 = vmatprep.subr.mxu0 0.0
        %364 = vmatpush1.msra.mxu0 0.0
        %365 = vmatprep.subr.mxu0 0.0
        %366 = vmatpush1.msra.mxu0 0.0
        %367 = vmatprep.subr.mxu0 0.0
        %368 = vmatpush1.msra.mxu0 0.0
        %369 = vmatprep.subr.mxu0 0.0
        %370 = vmatpush1.msra.mxu0 0.0
        %371 = vmatprep.subr.mxu0 0.0
        %372 = vmatpush1.msra.mxu0 0.0
        %373 = vmatprep.subr.mxu0 0.0
        %374 = vmatpush1.msra.mxu0 0.0
        %375 = vmatprep.subr.mxu0 0.0
        %376 = vmatpush1.msra.mxu0 0.0
        %377 = vmatprep.subr.mxu0 0.0
        %378 = vmatpush1.msra.mxu0 0.0
        %379 = vmatprep.subr.mxu0 0.0
        %380 = vmatpush1.msra.mxu0 0.0
        %381 = vmatprep.subr.mxu0 0.0
        %382 = vmatpush1.msra.mxu0 0.0
        %383 = vmatprep.subr.mxu0 0.0
        %384 = vmatpush1.msra.mxu0 0.0
        %385 = vmatprep.subr.mxu0 0.0
        %386 = vmatpush1.msra.mxu0 0.0
        %387 = vmatprep.subr.mxu0 0.0
        %388 = vmatpush1.msra.mxu0 0.0
        %389 = vmatprep.subr.mxu0 0.0
        %390 = vmatpush1.msra.mxu0 0.0
        %391 = vmatprep.subr.mxu0 0.0
        %392 = vmatpush1.msra.mxu0 0.0
        %393 = vmatprep.subr.mxu0 0.0
        %394 = vmatpush1.msra.mxu0 0.0
        %395 = vmatprep.subr.mxu0 0.0
        %396 = vmatpush1.msra.mxu0 0.0
        %397 = vmatprep.subr.mxu0 0.0
        %398 = vmatpush1.msra.mxu0 0.0
        %399 = vmatprep.subr.mxu0 0.0
        %400 = vmatpush1.msra.mxu0 0.0
        %401 = vmatprep.mubr.f32.mxu0 0.0
        %402 = vmatmul.mubr.f32.gmra.mrb[0].mxu0 %v237
        %v403 = vpop.f32.mrb[0].mxu0
        %v404 = vadd.f32 %v218, %v403
        %v405 = vpop.f32.mrb[0].mxu0
        %v406 = vadd.f32 %v218, %v405
        %407 = vmatprep.mubr.f32.mxu0 0.0
        %408 = vmatmul.mubr.f32.gmra.mrb[0].mxu0 %v240
        %v409 = vpop.f32.mrb[0].mxu0
        %v410 = vadd.f32 %v223, %v409
        %v411 = vpop.f32.mrb[0].mxu0
        %v412 = vadd.f32 %v223, %v411
        %413 = vmatprep.mubr.f32.mxu0 0.0
        %414 = vmatmul.mubr.f32.gmra.mrb[0].mxu0 %v243
        %v415 = vpop.f32.mrb[0].mxu0
        %v416 = vadd.f32 %v228, %v415
        %v417 = vpop.f32.mrb[0].mxu0
        %v418 = vadd.f32 %v228, %v417
        %419 = vmatprep.mubr.f32.mxu0 0.0
        %420 = vmatmul.mubr.f32.gmra.mrb[0].mxu0 %v246
        %v421 = vpop.f32.mrb[0].mxu0
        %v422 = vadd.f32 %v233, %v421
        %v423 = vpop.f32.mrb[0].mxu0
        %v424 = vadd.f32 %v233, %v423
        %425 = vdwg.mxu0
        %v426 = vmax.f32 %v315, 0.0
        %v427 = vmax.f32 %v317, 0.0
        %v428 = vmax.f32 %v404, 0.0
        %v429 = vmax.f32 %v406, 0.0
        %v430 = vmax.f32 %v321, 0.0
        %v431 = vmax.f32 %v323, 0.0
        %v432 = vmax.f32 %v410, 0.0
        %v433 = vmax.f32 %v412, 0.0
        %v434 = vmax.f32 %v327, 0.0
        %v435 = vmax.f32 %v329, 0.0
        %v436 = vmax.f32 %v416, 0.0
        %v437 = vmax.f32 %v418, 0.0
        %v438 = vmax.f32 %v333, 0.0
        %v439 = vmax.f32 %v335, 0.0
        %v440 = vmax.f32 %v422, 0.0
        %v441 = vmax.f32 %v424, 0.0
        %s442 = scalar_lea.vmem %s1, 32
        %v443 = vld [vmem:[%s442] sm:$0xff]
        %v444 = vld [vmem:[%s442 + $0x8] sm:$0xff]
        %v445 = vld [vmem:[%s442 + $0x10] sm:$0xff]
        %v446 = vld [vmem:[%s442 + $0x18] sm:$0xff]
        %s447 = scalar_lea.vmem %s2, 32
        %v448 = vld [vmem:[%s447] sm:$0xff]
        %v449 = vld [vmem:[%s447 + $0x8] sm:$0xff]
        %v450 = vld [vmem:[%s447 + $0x10] sm:$0xff]
        %v451 = vld [vmem:[%s447 + $0x18] sm:$0xff]
        %453 = vset.pattern.permute.xlu0 0
        %454 = vperm.xlu0 %453, %v448
        %v455 = vpop.permute.xlu0 %454
        %458 = vset.pattern.permute.xlu0 0
        %459 = vperm.xlu0 %458, %v449
        %v460 = vpop.permute.xlu0 %459
        %463 = vset.pattern.permute.xlu0 0
        %464 = vperm.xlu0 %463, %v450
        %v465 = vpop.permute.xlu0 %464
        %468 = vset.pattern.permute.xlu0 0
        %469 = vperm.xlu0 %468, %v451
        %v470 = vpop.permute.xlu0 %469
        %v473 = vsel %vm235, %v443, 0
        %v476 = vsel %vm235, %v444, 0
        %v479 = vsel %vm235, %v445, 0
        %v482 = vsel %vm235, %v446, 0
        %484 = vmatprep.subr.mxu0 %v427
        %485 = vmatpush1.msra.mxu0 %v426
        %486 = vmatprep.subr.mxu0 %v431
        %487 = vmatpush1.msra.mxu0 %v430
        %488 = vmatprep.subr.mxu0 %v435
        %489 = vmatpush1.msra.mxu0 %v434
        %490 = vmatprep.subr.mxu0 %v439
        %491 = vmatpush1.msra.mxu0 %v438
        %492 = vmatprep.subr.mxu0 0.0
        %493 = vmatpush1.msra.mxu0 0.0
        %494 = vmatprep.subr.mxu0 0.0
        %495 = vmatpush1.msra.mxu0 0.0
        %496 = vmatprep.subr.mxu0 0.0
        %497 = vmatpush1.msra.mxu0 0.0
        %498 = vmatprep.subr.mxu0 0.0
        %499 = vmatpush1.msra.mxu0 0.0
        %500 = vmatprep.subr.mxu0 0.0
        %501 = vmatpush1.msra.mxu0 0.0
        %502 = vmatprep.subr.mxu0 0.0
        %503 = vmatpush1.msra.mxu0 0.0
        %504 = vmatprep.subr.mxu0 0.0
        %505 = vmatpush1.msra.mxu0 0.0
        %506 = vmatprep.subr.mxu0 0.0
        %507 = vmatpush1.msra.mxu0 0.0
        %508 = vmatprep.subr.mxu0 0.0
        %509 = vmatpush1.msra.mxu0 0.0
        %510 = vmatprep.subr.mxu0 0.0
        %511 = vmatpush1.msra.mxu0 0.0
        %512 = vmatprep.subr.mxu0 0.0
        %513 = vmatpush1.msra.mxu0 0.0
        %514 = vmatprep.subr.mxu0 0.0
        %515 = vmatpush1.msra.mxu0 0.0
        %516 = vmatprep.subr.mxu0 0.0
        %517 = vmatpush1.msra.mxu0 0.0
        %518 = vmatprep.subr.mxu0 0.0
        %519 = vmatpush1.msra.mxu0 0.0
        %520 = vmatprep.subr.mxu0 0.0
        %521 = vmatpush1.msra.mxu0 0.0
        %522 = vmatprep.subr.mxu0 0.0
        %523 = vmatpush1.msra.mxu0 0.0
        %524 = vmatprep.subr.mxu0 0.0
        %525 = vmatpush1.msra.mxu0 0.0
        %526 = vmatprep.subr.mxu0 0.0
        %527 = vmatpush1.msra.mxu0 0.0
        %528 = vmatprep.subr.mxu0 0.0
        %529 = vmatpush1.msra.mxu0 0.0
        %530 = vmatprep.subr.mxu0 0.0
        %531 = vmatpush1.msra.mxu0 0.0
        %532 = vmatprep.subr.mxu0 0.0
        %533 = vmatpush1.msra.mxu0 0.0
        %534 = vmatprep.subr.mxu0 0.0
        %535 = vmatpush1.msra.mxu0 0.0
        %536 = vmatprep.subr.mxu0 0.0
        %537 = vmatpush1.msra.mxu0 0.0
        %538 = vmatprep.subr.mxu0 0.0
        %539 = vmatpush1.msra.mxu0 0.0
        %540 = vmatprep.subr.mxu0 0.0
        %541 = vmatpush1.msra.mxu0 0.0
        %542 = vmatprep.subr.mxu0 0.0
        %543 = vmatpush1.msra.mxu0 0.0
        %544 = vmatprep.subr.mxu0 0.0
        %545 = vmatpush1.msra.mxu0 0.0
        %546 = vmatprep.subr.mxu0 0.0
        %547 = vmatpush1.msra.mxu0 0.0
        %548 = vmatprep.mubr.f32.mxu0 0.0
        %549 = vmatmul.mubr.f32.gmra.mrb[0].mxu0 %v473
        %v550 = vpop.f32.mrb[0].mxu0
        %v551 = vadd.f32 %v455, %v550
        %v552 = vpop.f32.mrb[0].mxu0
        %v553 = vadd.f32 %v455, %v552
        %554 = vmatprep.mubr.f32.mxu0 0.0
        %555 = vmatmul.mubr.f32.gmra.mrb[0].mxu0 %v476
        %v556 = vpop.f32.mrb[0].mxu0
        %v557 = vadd.f32 %v460, %v556
        %v558 = vpop.f32.mrb[0].mxu0
        %v559 = vadd.f32 %v460, %v558
        %560 = vmatprep.mubr.f32.mxu0 0.0
        %561 = vmatmul.mubr.f32.gmra.mrb[0].mxu0 %v479
        %v562 = vpop.f32.mrb[0].mxu0
        %v563 = vadd.f32 %v465, %v562
        %v564 = vpop.f32.mrb[0].mxu0
        %v565 = vadd.f32 %v465, %v564
        %566 = vmatprep.mubr.f32.mxu0 0.0
        %567 = vmatmul.mubr.f32.gmra.mrb[0].mxu0 %v482
        %v568 = vpop.f32.mrb[0].mxu0
        %v569 = vadd.f32 %v470, %v568
        %v570 = vpop.f32.mrb[0].mxu0
        %v571 = vadd.f32 %v470, %v570
        %572 = vdwg.mxu0
        %573 = vmatprep.subr.mxu0 %v429
        %574 = vmatpush1.msra.mxu0 %v428
        %575 = vmatprep.subr.mxu0 %v433
        %576 = vmatpush1.msra.mxu0 %v432
        %577 = vmatprep.subr.mxu0 %v437
        %578 = vmatpush1.msra.mxu0 %v436
        %579 = vmatprep.subr.mxu0 %v441
        %580 = vmatpush1.msra.mxu0 %v440
        %581 = vmatprep.subr.mxu0 0.0
        %582 = vmatpush1.msra.mxu0 0.0
        %583 = vmatprep.subr.mxu0 0.0
        %584 = vmatpush1.msra.mxu0 0.0
        %585 = vmatprep.subr.mxu0 0.0
        %586 = vmatpush1.msra.mxu0 0.0
        %587 = vmatprep.subr.mxu0 0.0
        %588 = vmatpush1.msra.mxu0 0.0
        %589 = vmatprep.subr.mxu0 0.0
        %590 = vmatpush1.msra.mxu0 0.0
        %591 = vmatprep.subr.mxu0 0.0
        %592 = vmatpush1.msra.mxu0 0.0
        %593 = vmatprep.subr.mxu0 0.0
        %594 = vmatpush1.msra.mxu0 0.0
        %595 = vmatprep.subr.mxu0 0.0
        %596 = vmatpush1.msra.mxu0 0.0
        %597 = vmatprep.subr.mxu0 0.0
        %598 = vmatpush1.msra.mxu0 0.0
        %599 = vmatprep.subr.mxu0 0.0
        %600 = vmatpush1.msra.mxu0 0.0
        %601 = vmatprep.subr.mxu0 0.0
        %602 = vmatpush1.msra.mxu0 0.0
        %603 = vmatprep.subr.mxu0 0.0
        %604 = vmatpush1.msra.mxu0 0.0
        %605 = vmatprep.subr.mxu0 0.0
        %606 = vmatpush1.msra.mxu0 0.0
        %607 = vmatprep.subr.mxu0 0.0
        %608 = vmatpush1.msra.mxu0 0.0
        %609 = vmatprep.subr.mxu0 0.0
        %610 = vmatpush1.msra.mxu0 0.0
        %611 = vmatprep.subr.mxu0 0.0
        %612 = vmatpush1.msra.mxu0 0.0
        %613 = vmatprep.subr.mxu0 0.0
        %614 = vmatpush1.msra.mxu0 0.0
        %615 = vmatprep.subr.mxu0 0.0
        %616 = vmatpush1.msra.mxu0 0.0
        %617 = vmatprep.subr.mxu0 0.0
        %618 = vmatpush1.msra.mxu0 0.0
        %619 = vmatprep.subr.mxu0 0.0
        %620 = vmatpush1.msra.mxu0 0.0
        %621 = vmatprep.subr.mxu0 0.0
        %622 = vmatpush1.msra.mxu0 0.0
        %623 = vmatprep.subr.mxu0 0.0
        %624 = vmatpush1.msra.mxu0 0.0
        %625 = vmatprep.subr.mxu0 0.0
        %626 = vmatpush1.msra.mxu0 0.0
        %627 = vmatprep.subr.mxu0 0.0
        %628 = vmatpush1.msra.mxu0 0.0
        %629 = vmatprep.subr.mxu0 0.0
        %630 = vmatpush1.msra.mxu0 0.0
        %631 = vmatprep.subr.mxu0 0.0
        %632 = vmatpush1.msra.mxu0 0.0
        %633 = vmatprep.subr.mxu0 0.0
        %634 = vmatpush1.msra.mxu0 0.0
        %635 = vmatprep.subr.mxu0 0.0
        %636 = vmatpush1.msra.mxu0 0.0
        %637 = vmatprep.mubr.f32.mxu0 0.0
        %638 = vmatmul.mubr.f32.gmra.mrb[0].mxu0 %v473
        %v639 = vpop.f32.mrb[0].mxu0
        %v640 = vadd.f32 %v455, %v639
        %v641 = vpop.f32.mrb[0].mxu0
        %v642 = vadd.f32 %v455, %v641
        %643 = vmatprep.mubr.f32.mxu0 0.0
        %644 = vmatmul.mubr.f32.gmra.mrb[0].mxu0 %v476
        %v645 = vpop.f32.mrb[0].mxu0
        %v646 = vadd.f32 %v460, %v645
        %v647 = vpop.f32.mrb[0].mxu0
        %v648 = vadd.f32 %v460, %v647
        %649 = vmatprep.mubr.f32.mxu0 0.0
        %650 = vmatmul.mubr.f32.gmra.mrb[0].mxu0 %v479
        %v651 = vpop.f32.mrb[0].mxu0
        %v652 = vadd.f32 %v465, %v651
        %v653 = vpop.f32.mrb[0].mxu0
        %v654 = vadd.f32 %v465, %v653
        %655 = vmatprep.mubr.f32.mxu0 0.0
        %656 = vmatmul.mubr.f32.gmra.mrb[0].mxu0 %v482
        %v657 = vpop.f32.mrb[0].mxu0
        %v658 = vadd.f32 %v470, %v657
        %v659 = vpop.f32.mrb[0].mxu0
        %v660 = vadd.f32 %v470, %v659
        %661 = vdwg.mxu0
        %v662 = vmax.f32 %v551, 0.0
        %v663 = vmax.f32 %v553, 0.0
        %v664 = vmax.f32 %v640, 0.0
        %v665 = vmax.f32 %v642, 0.0
        %v666 = vmax.f32 %v557, 0.0
        %v667 = vmax.f32 %v559, 0.0
        %v668 = vmax.f32 %v646, 0.0
        %v669 = vmax.f32 %v648, 0.0
        %v670 = vmax.f32 %v563, 0.0
        %v671 = vmax.f32 %v565, 0.0
        %v672 = vmax.f32 %v652, 0.0
        %v673 = vmax.f32 %v654, 0.0
        %v674 = vmax.f32 %v569, 0.0
        %v675 = vmax.f32 %v571, 0.0
        %v676 = vmax.f32 %v658, 0.0
        %v677 = vmax.f32 %v660, 0.0
        %s678 = scalar_lea.vmem %s1, 64
        %v679 = vld [vmem:[%s678] sm:$0xff]
        %v680 = vld [vmem:[%s678 + $0x8] sm:$0xff]
        %v681 = vld [vmem:[%s678 + $0x10] sm:$0xff]
        %v682 = vld [vmem:[%s678 + $0x18] sm:$0xff]
        %s683 = scalar_lea.vmem %s2, 64
        %v684 = vld [vmem:[%s683] sm:$0xff]
        %v685 = vld [vmem:[%s683 + $0x8] sm:$0xff]
        %v686 = vld [vmem:[%s683 + $0x10] sm:$0xff]
        %v687 = vld [vmem:[%s683 + $0x18] sm:$0xff]
        %689 = vset.pattern.permute.xlu0 0
        %690 = vperm.xlu0 %689, %v684
        %v691 = vpop.permute.xlu0 %690
        %694 = vset.pattern.permute.xlu0 0
        %695 = vperm.xlu0 %694, %v685
        %v696 = vpop.permute.xlu0 %695
        %699 = vset.pattern.permute.xlu0 0
        %700 = vperm.xlu0 %699, %v686
        %v701 = vpop.permute.xlu0 %700
        %704 = vset.pattern.permute.xlu0 0
        %705 = vperm.xlu0 %704, %v687
        %v706 = vpop.permute.xlu0 %705
        %v709 = vsel %vm235, %v679, 0
        %v712 = vsel %vm235, %v680, 0
        %v715 = vsel %vm235, %v681, 0
        %v718 = vsel %vm235, %v682, 0
        %720 = vmatprep.subr.mxu0 %v663
        %721 = vmatpush1.msra.mxu0 %v662
        %722 = vmatprep.subr.mxu0 %v667
        %723 = vmatpush1.msra.mxu0 %v666
        %724 = vmatprep.subr.mxu0 %v671
        %725 = vmatpush1.msra.mxu0 %v670
        %726 = vmatprep.subr.mxu0 %v675
        %727 = vmatpush1.msra.mxu0 %v674
        %728 = vmatprep.subr.mxu0 0.0
        %729 = vmatpush1.msra.mxu0 0.0
        %730 = vmatprep.subr.mxu0 0.0
        %731 = vmatpush1.msra.mxu0 0.0
        %732 = vmatprep.subr.mxu0 0.0
        %733 = vmatpush1.msra.mxu0 0.0
        %734 = vmatprep.subr.mxu0 0.0
        %735 = vmatpush1.msra.mxu0 0.0
        %736 = vmatprep.subr.mxu0 0.0
        %737 = vmatpush1.msra.mxu0 0.0
        %738 = vmatprep.subr.mxu0 0.0
        %739 = vmatpush1.msra.mxu0 0.0
        %740 = vmatprep.subr.mxu0 0.0
        %741 = vmatpush1.msra.mxu0 0.0
        %742 = vmatprep.subr.mxu0 0.0
        %743 = vmatpush1.msra.mxu0 0.0
        %744 = vmatprep.subr.mxu0 0.0
        %745 = vmatpush1.msra.mxu0 0.0
        %746 = vmatprep.subr.mxu0 0.0
        %747 = vmatpush1.msra.mxu0 0.0
        %748 = vmatprep.subr.mxu0 0.0
        %749 = vmatpush1.msra.mxu0 0.0
        %750 = vmatprep.subr.mxu0 0.0
        %751 = vmatpush1.msra.mxu0 0.0
        %752 = vmatprep.subr.mxu0 0.0
        %753 = vmatpush1.msra.mxu0 0.0
        %754 = vmatprep.subr.mxu0 0.0
        %755 = vmatpush1.msra.mxu0 0.0
        %756 = vmatprep.subr.mxu0 0.0
        %757 = vmatpush1.msra.mxu0 0.0
        %758 = vmatprep.subr.mxu0 0.0
        %759 = vmatpush1.msra.mxu0 0.0
        %760 = vmatprep.subr.mxu0 0.0
        %761 = vmatpush1.msra.mxu0 0.0
        %762 = vmatprep.subr.mxu0 0.0
        %763 = vmatpush1.msra.mxu0 0.0
        %764 = vmatprep.subr.mxu0 0.0
        %765 = vmatpush1.msra.mxu0 0.0
        %766 = vmatprep.subr.mxu0 0.0
        %767 = vmatpush1.msra.mxu0 0.0
        %768 = vmatprep.subr.mxu0 0.0
        %769 = vmatpush1.msra.mxu0 0.0
        %770 = vmatprep.subr.mxu0 0.0
        %771 = vmatpush1.msra.mxu0 0.0
        %772 = vmatprep.subr.mxu0 0.0
        %773 = vmatpush1.msra.mxu0 0.0
        %774 = vmatprep.subr.mxu0 0.0
        %775 = vmatpush1.msra.mxu0 0.0
        %776 = vmatprep.subr.mxu0 0.0
        %777 = vmatpush1.msra.mxu0 0.0
        %778 = vmatprep.subr.mxu0 0.0
        %779 = vmatpush1.msra.mxu0 0.0
        %780 = vmatprep.subr.mxu0 0.0
        %781 = vmatpush1.msra.mxu0 0.0
        %782 = vmatprep.subr.mxu0 0.0
        %783 = vmatpush1.msra.mxu0 0.0
        %784 = vmatprep.mubr.f32.mxu0 0.0
        %785 = vmatmul.mubr.f32.gmra.mrb[0].mxu0 %v709
        %v786 = vpop.f32.mrb[0].mxu0
        %v787 = vadd.f32 %v691, %v786
        %v788 = vpop.f32.mrb[0].mxu0
        %v789 = vadd.f32 %v691, %v788
        %790 = vmatprep.mubr.f32.mxu0 0.0
        %791 = vmatmul.mubr.f32.gmra.mrb[0].mxu0 %v712
        %v792 = vpop.f32.mrb[0].mxu0
        %v793 = vadd.f32 %v696, %v792
        %v794 = vpop.f32.mrb[0].mxu0
        %v795 = vadd.f32 %v696, %v794
        %796 = vmatprep.mubr.f32.mxu0 0.0
        %797 = vmatmul.mubr.f32.gmra.mrb[0].mxu0 %v715
        %v798 = vpop.f32.mrb[0].mxu0
        %v799 = vadd.f32 %v701, %v798
        %v800 = vpop.f32.mrb[0].mxu0
        %v801 = vadd.f32 %v701, %v800
        %802 = vmatprep.mubr.f32.mxu0 0.0
        %803 = vmatmul.mubr.f32.gmra.mrb[0].mxu0 %v718
        %v804 = vpop.f32.mrb[0].mxu0
        %v805 = vadd.f32 %v706, %v804
        %v806 = vpop.f32.mrb[0].mxu0
        %v807 = vadd.f32 %v706, %v806
        %808 = vdwg.mxu0
        %809 = vmatprep.subr.mxu0 %v665
        %810 = vmatpush1.msra.mxu0 %v664
        %811 = vmatprep.subr.mxu0 %v669
        %812 = vmatpush1.msra.mxu0 %v668
        %813 = vmatprep.subr.mxu0 %v673
        %814 = vmatpush1.msra.mxu0 %v672
        %815 = vmatprep.subr.mxu0 %v677
        %816 = vmatpush1.msra.mxu0 %v676
        %817 = vmatprep.subr.mxu0 0.0
        %818 = vmatpush1.msra.mxu0 0.0
        %819 = vmatprep.subr.mxu0 0.0
        %820 = vmatpush1.msra.mxu0 0.0
        %821 = vmatprep.subr.mxu0 0.0
        %822 = vmatpush1.msra.mxu0 0.0
        %823 = vmatprep.subr.mxu0 0.0
        %824 = vmatpush1.msra.mxu0 0.0
        %825 = vmatprep.subr.mxu0 0.0
        %826 = vmatpush1.msra.mxu0 0.0
        %827 = vmatprep.subr.mxu0 0.0
        %828 = vmatpush1.msra.mxu0 0.0
        %829 = vmatprep.subr.mxu0 0.0
        %830 = vmatpush1.msra.mxu0 0.0
        %831 = vmatprep.subr.mxu0 0.0
        %832 = vmatpush1.msra.mxu0 0.0
        %833 = vmatprep.subr.mxu0 0.0
        %834 = vmatpush1.msra.mxu0 0.0
        %835 = vmatprep.subr.mxu0 0.0
        %836 = vmatpush1.msra.mxu0 0.0
        %837 = vmatprep.subr.mxu0 0.0
        %838 = vmatpush1.msra.mxu0 0.0
        %839 = vmatprep.subr.mxu0 0.0
        %840 = vmatpush1.msra.mxu0 0.0
        %841 = vmatprep.subr.mxu0 0.0
        %842 = vmatpush1.msra.mxu0 0.0
        %843 = vmatprep.subr.mxu0 0.0
        %844 = vmatpush1.msra.mxu0 0.0
        %845 = vmatprep.subr.mxu0 0.0
        %846 = vmatpush1.msra.mxu0 0.0
        %847 = vmatprep.subr.mxu0 0.0
        %848 = vmatpush1.msra.mxu0 0.0
        %849 = vmatprep.subr.mxu0 0.0
        %850 = vmatpush1.msra.mxu0 0.0
        %851 = vmatprep.subr.mxu0 0.0
        %852 = vmatpush1.msra.mxu0 0.0
        %853 = vmatprep.subr.mxu0 0.0
        %854 = vmatpush1.msra.mxu0 0.0
        %855 = vmatprep.subr.mxu0 0.0
        %856 = vmatpush1.msra.mxu0 0.0
        %857 = vmatprep.subr.mxu0 0.0
        %858 = vmatpush1.msra.mxu0 0.0
        %859 = vmatprep.subr.mxu0 0.0
        %860 = vmatpush1.msra.mxu0 0.0
        %861 = vmatprep.subr.mxu0 0.0
        %862 = vmatpush1.msra.mxu0 0.0
        %863 = vmatprep.subr.mxu0 0.0
        %864 = vmatpush1.msra.mxu0 0.0
        %865 = vmatprep.subr.mxu0 0.0
        %866 = vmatpush1.msra.mxu0 0.0
        %867 = vmatprep.subr.mxu0 0.0
        %868 = vmatpush1.msra.mxu0 0.0
        %869 = vmatprep.subr.mxu0 0.0
        %870 = vmatpush1.msra.mxu0 0.0
        %871 = vmatprep.subr.mxu0 0.0
        %872 = vmatpush1.msra.mxu0 0.0
        %873 = vmatprep.mubr.f32.mxu0 0.0
        %874 = vmatmul.mubr.f32.gmra.mrb[0].mxu0 %v709
        %v875 = vpop.f32.mrb[0].mxu0
        %v876 = vadd.f32 %v691, %v875
        %v877 = vpop.f32.mrb[0].mxu0
        %v878 = vadd.f32 %v691, %v877
        %879 = vmatprep.mubr.f32.mxu0 0.0
        %880 = vmatmul.mubr.f32.gmra.mrb[0].mxu0 %v712
        %v881 = vpop.f32.mrb[0].mxu0
        %v882 = vadd.f32 %v696, %v881
        %v883 = vpop.f32.mrb[0].mxu0
        %v884 = vadd.f32 %v696, %v883
        %885 = vmatprep.mubr.f32.mxu0 0.0
        %886 = vmatmul.mubr.f32.gmra.mrb[0].mxu0 %v715
        %v887 = vpop.f32.mrb[0].mxu0
        %v888 = vadd.f32 %v701, %v887
        %v889 = vpop.f32.mrb[0].mxu0
        %v890 = vadd.f32 %v701, %v889
        %891 = vmatprep.mubr.f32.mxu0 0.0
        %892 = vmatmul.mubr.f32.gmra.mrb[0].mxu0 %v718
        %v893 = vpop.f32.mrb[0].mxu0
        %v894 = vadd.f32 %v706, %v893
        %v895 = vpop.f32.mrb[0].mxu0
        %v896 = vadd.f32 %v706, %v895
        %897 = vdwg.mxu0
        %v898 = vmax.f32 %v787, 0.0
        %v899 = vmax.f32 %v789, 0.0
        %v900 = vmax.f32 %v876, 0.0
        %v901 = vmax.f32 %v878, 0.0
        %v902 = vmax.f32 %v793, 0.0
        %v903 = vmax.f32 %v795, 0.0
        %v904 = vmax.f32 %v882, 0.0
        %v905 = vmax.f32 %v884, 0.0
        %v906 = vmax.f32 %v799, 0.0
        %v907 = vmax.f32 %v801, 0.0
        %v908 = vmax.f32 %v888, 0.0
        %v909 = vmax.f32 %v890, 0.0
        %v910 = vmax.f32 %v805, 0.0
        %v911 = vmax.f32 %v807, 0.0
        %v912 = vmax.f32 %v894, 0.0
        %v913 = vmax.f32 %v896, 0.0
        %s914 = scalar_lea.vmem %s1, 96
        %v915 = vld [vmem:[%s914] sm:$0xff]
        %v916 = vld [vmem:[%s914 + $0x8] sm:$0xff]
        %v917 = vld [vmem:[%s914 + $0x10] sm:$0xff]
        %v918 = vld [vmem:[%s914 + $0x18] sm:$0xff]
        %s919 = scalar_lea.vmem %s2, 96
        %v920 = vld [vmem:[%s919] sm:$0xff]
        %v921 = vld [vmem:[%s919 + $0x8] sm:$0xff]
        %v922 = vld [vmem:[%s919 + $0x10] sm:$0xff]
        %v923 = vld [vmem:[%s919 + $0x18] sm:$0xff]
        %925 = vset.pattern.permute.xlu0 0
        %926 = vperm.xlu0 %925, %v920
        %v927 = vpop.permute.xlu0 %926
        %930 = vset.pattern.permute.xlu0 0
        %931 = vperm.xlu0 %930, %v921
        %v932 = vpop.permute.xlu0 %931
        %935 = vset.pattern.permute.xlu0 0
        %936 = vperm.xlu0 %935, %v922
        %v937 = vpop.permute.xlu0 %936
        %940 = vset.pattern.permute.xlu0 0
        %941 = vperm.xlu0 %940, %v923
        %v942 = vpop.permute.xlu0 %941
        %v945 = vsel %vm235, %v915, 0
        %v948 = vsel %vm235, %v916, 0
        %v951 = vsel %vm235, %v917, 0
        %v954 = vsel %vm235, %v918, 0
        %956 = vmatprep.subr.mxu0 %v899
        %957 = vmatpush1.msra.mxu0 %v898
        %958 = vmatprep.subr.mxu0 %v903
        %959 = vmatpush1.msra.mxu0 %v902
        %960 = vmatprep.subr.mxu0 %v907
        %961 = vmatpush1.msra.mxu0 %v906
        %962 = vmatprep.subr.mxu0 %v911
        %963 = vmatpush1.msra.mxu0 %v910
        %964 = vmatprep.subr.mxu0 0.0
        %965 = vmatpush1.msra.mxu0 0.0
        %966 = vmatprep.subr.mxu0 0.0
        %967 = vmatpush1.msra.mxu0 0.0
        %968 = vmatprep.subr.mxu0 0.0
        %969 = vmatpush1.msra.mxu0 0.0
        %970 = vmatprep.subr.mxu0 0.0
        %971 = vmatpush1.msra.mxu0 0.0
        %972 = vmatprep.subr.mxu0 0.0
        %973 = vmatpush1.msra.mxu0 0.0
        %974 = vmatprep.subr.mxu0 0.0
        %975 = vmatpush1.msra.mxu0 0.0
        %976 = vmatprep.subr.mxu0 0.0
        %977 = vmatpush1.msra.mxu0 0.0
        %978 = vmatprep.subr.mxu0 0.0
        %979 = vmatpush1.msra.mxu0 0.0
        %980 = vmatprep.subr.mxu0 0.0
        %981 = vmatpush1.msra.mxu0 0.0
        %982 = vmatprep.subr.mxu0 0.0
        %983 = vmatpush1.msra.mxu0 0.0
        %984 = vmatprep.subr.mxu0 0.0
        %985 = vmatpush1.msra.mxu0 0.0
        %986 = vmatprep.subr.mxu0 0.0
        %987 = vmatpush1.msra.mxu0 0.0
        %988 = vmatprep.subr.mxu0 0.0
        %989 = vmatpush1.msra.mxu0 0.0
        %990 = vmatprep.subr.mxu0 0.0
        %991 = vmatpush1.msra.mxu0 0.0
        %992 = vmatprep.subr.mxu0 0.0
        %993 = vmatpush1.msra.mxu0 0.0
        %994 = vmatprep.subr.mxu0 0.0
        %995 = vmatpush1.msra.mxu0 0.0
        %996 = vmatprep.subr.mxu0 0.0
        %997 = vmatpush1.msra.mxu0 0.0
        %998 = vmatprep.subr.mxu0 0.0
        %999 = vmatpush1.msra.mxu0 0.0
        %1000 = vmatprep.subr.mxu0 0.0
        %1001 = vmatpush1.msra.mxu0 0.0
        %1002 = vmatprep.subr.mxu0 0.0
        %1003 = vmatpush1.msra.mxu0 0.0
        %1004 = vmatprep.subr.mxu0 0.0
        %1005 = vmatpush1.msra.mxu0 0.0
        %1006 = vmatprep.subr.mxu0 0.0
        %1007 = vmatpush1.msra.mxu0 0.0
        %1008 = vmatprep.subr.mxu0 0.0
        %1009 = vmatpush1.msra.mxu0 0.0
        %1010 = vmatprep.subr.mxu0 0.0
        %1011 = vmatpush1.msra.mxu0 0.0
        %1012 = vmatprep.subr.mxu0 0.0
        %1013 = vmatpush1.msra.mxu0 0.0
        %1014 = vmatprep.subr.mxu0 0.0
        %1015 = vmatpush1.msra.mxu0 0.0
        %1016 = vmatprep.subr.mxu0 0.0
        %1017 = vmatpush1.msra.mxu0 0.0
        %1018 = vmatprep.subr.mxu0 0.0
        %1019 = vmatpush1.msra.mxu0 0.0
        %1020 = vmatprep.mubr.f32.mxu0 0.0
        %1021 = vmatmul.mubr.f32.gmra.mrb[0].mxu0 %v945
        %v1022 = vpop.f32.mrb[0].mxu0
        %v1023 = vadd.f32 %v927, %v1022
        %v1024 = vpop.f32.mrb[0].mxu0
        %v1025 = vadd.f32 %v927, %v1024
        %1026 = vmatprep.mubr.f32.mxu0 0.0
        %1027 = vmatmul.mubr.f32.gmra.mrb[0].mxu0 %v948
        %v1028 = vpop.f32.mrb[0].mxu0
        %v1029 = vadd.f32 %v932, %v1028
        %v1030 = vpop.f32.mrb[0].mxu0
        %v1031 = vadd.f32 %v932, %v1030
        %1032 = vmatprep.mubr.f32.mxu0 0.0
        %1033 = vmatmul.mubr.f32.gmra.mrb[0].mxu0 %v951
        %v1034 = vpop.f32.mrb[0].mxu0
        %v1035 = vadd.f32 %v937, %v1034
        %v1036 = vpop.f32.mrb[0].mxu0
        %v1037 = vadd.f32 %v937, %v1036
        %1038 = vmatprep.mubr.f32.mxu0 0.0
        %1039 = vmatmul.mubr.f32.gmra.mrb[0].mxu0 %v954
        %v1040 = vpop.f32.mrb[0].mxu0
        %v1041 = vadd.f32 %v942, %v1040
        %v1042 = vpop.f32.mrb[0].mxu0
        %v1043 = vadd.f32 %v942, %v1042
        %1044 = vdwg.mxu0
        %1045 = vmatprep.subr.mxu0 %v901
        %1046 = vmatpush1.msra.mxu0 %v900
        %1047 = vmatprep.subr.mxu0 %v905
        %1048 = vmatpush1.msra.mxu0 %v904
        %1049 = vmatprep.subr.mxu0 %v909
        %1050 = vmatpush1.msra.mxu0 %v908
        %1051 = vmatprep.subr.mxu0 %v913
        %1052 = vmatpush1.msra.mxu0 %v912
        %1053 = vmatprep.subr.mxu0 0.0
        %1054 = vmatpush1.msra.mxu0 0.0
        %1055 = vmatprep.subr.mxu0 0.0
        %1056 = vmatpush1.msra.mxu0 0.0
        %1057 = vmatprep.subr.mxu0 0.0
        %1058 = vmatpush1.msra.mxu0 0.0
        %1059 = vmatprep.subr.mxu0 0.0
        %1060 = vmatpush1.msra.mxu0 0.0
        %1061 = vmatprep.subr.mxu0 0.0
        %1062 = vmatpush1.msra.mxu0 0.0
        %1063 = vmatprep.subr.mxu0 0.0
        %1064 = vmatpush1.msra.mxu0 0.0
        %1065 = vmatprep.subr.mxu0 0.0
        %1066 = vmatpush1.msra.mxu0 0.0
        %1067 = vmatprep.subr.mxu0 0.0
        %1068 = vmatpush1.msra.mxu0 0.0
        %1069 = vmatprep.subr.mxu0 0.0
        %1070 = vmatpush1.msra.mxu0 0.0
        %1071 = vmatprep.subr.mxu0 0.0
        %1072 = vmatpush1.msra.mxu0 0.0
        %1073 = vmatprep.subr.mxu0 0.0
        %1074 = vmatpush1.msra.mxu0 0.0
        %1075 = vmatprep.subr.mxu0 0.0
        %1076 = vmatpush1.msra.mxu0 0.0
        %1077 = vmatprep.subr.mxu0 0.0
        %1078 = vmatpush1.msra.mxu0 0.0
        %1079 = vmatprep.subr.mxu0 0.0
        %1080 = vmatpush1.msra.mxu0 0.0
        %1081 = vmatprep.subr.mxu0 0.0
        %1082 = vmatpush1.msra.mxu0 0.0
        %1083 = vmatprep.subr.mxu0 0.0
        %1084 = vmatpush1.msra.mxu0 0.0
        %1085 = vmatprep.subr.mxu0 0.0
        %1086 = vmatpush1.msra.mxu0 0.0
        %1087 = vmatprep.subr.mxu0 0.0
        %1088 = vmatpush1.msra.mxu0 0.0
        %1089 = vmatprep.subr.mxu0 0.0
        %1090 = vmatpush1.msra.mxu0 0.0
        %1091 = vmatprep.subr.mxu0 0.0
        %1092 = vmatpush1.msra.mxu0 0.0
        %1093 = vmatprep.subr.mxu0 0.0
        %1094 = vmatpush1.msra.mxu0 0.0
        %1095 = vmatprep.subr.mxu0 0.0
        %1096 = vmatpush1.msra.mxu0 0.0
        %1097 = vmatprep.subr.mxu0 0.0
        %1098 = vmatpush1.msra.mxu0 0.0
        %1099 = vmatprep.subr.mxu0 0.0
        %1100 = vmatpush1.msra.mxu0 0.0
        %1101 = vmatprep.subr.mxu0 0.0
        %1102 = vmatpush1.msra.mxu0 0.0
        %1103 = vmatprep.subr.mxu0 0.0
        %1104 = vmatpush1.msra.mxu0 0.0
        %1105 = vmatprep.subr.mxu0 0.0
        %1106 = vmatpush1.msra.mxu0 0.0
        %1107 = vmatprep.subr.mxu0 0.0
        %1108 = vmatpush1.msra.mxu0 0.0
        %1109 = vmatprep.mubr.f32.mxu0 0.0
        %1110 = vmatmul.mubr.f32.gmra.mrb[0].mxu0 %v945
        %v1111 = vpop.f32.mrb[0].mxu0
        %v1112 = vadd.f32 %v927, %v1111
        %v1113 = vpop.f32.mrb[0].mxu0
        %v1114 = vadd.f32 %v927, %v1113
        %1115 = vmatprep.mubr.f32.mxu0 0.0
        %1116 = vmatmul.mubr.f32.gmra.mrb[0].mxu0 %v948
        %v1117 = vpop.f32.mrb[0].mxu0
        %v1118 = vadd.f32 %v932, %v1117
        %v1119 = vpop.f32.mrb[0].mxu0
        %v1120 = vadd.f32 %v932, %v1119
        %1121 = vmatprep.mubr.f32.mxu0 0.0
        %1122 = vmatmul.mubr.f32.gmra.mrb[0].mxu0 %v951
        %v1123 = vpop.f32.mrb[0].mxu0
        %v1124 = vadd.f32 %v937, %v1123
        %v1125 = vpop.f32.mrb[0].mxu0
        %v1126 = vadd.f32 %v937, %v1125
        %1127 = vmatprep.mubr.f32.mxu0 0.0
        %1128 = vmatmul.mubr.f32.gmra.mrb[0].mxu0 %v954
        %v1129 = vpop.f32.mrb[0].mxu0
        %v1130 = vadd.f32 %v942, %v1129
        %v1131 = vpop.f32.mrb[0].mxu0
        %v1132 = vadd.f32 %v942, %v1131
        %1133 = vdwg.mxu0
        %v1134 = vmax.f32 %v1023, 0.0
        %v1135 = vmax.f32 %v1025, 0.0
        %v1136 = vmax.f32 %v1112, 0.0
        %v1137 = vmax.f32 %v1114, 0.0
        %v1138 = vmax.f32 %v1029, 0.0
        %v1139 = vmax.f32 %v1031, 0.0
        %v1140 = vmax.f32 %v1118, 0.0
        %v1141 = vmax.f32 %v1120, 0.0
        %v1142 = vmax.f32 %v1035, 0.0
        %v1143 = vmax.f32 %v1037, 0.0
        %v1144 = vmax.f32 %v1124, 0.0
        %v1145 = vmax.f32 %v1126, 0.0
        %v1146 = vmax.f32 %v1041, 0.0
        %v1147 = vmax.f32 %v1043, 0.0
        %v1148 = vmax.f32 %v1130, 0.0
        %v1149 = vmax.f32 %v1132, 0.0
        %s1150 = scalar_lea.vmem %s1, 128
        %v1151 = vld [vmem:[%s1150] sm:$0xff]
        %v1152 = vld [vmem:[%s1150 + $0x8] sm:$0xff]
        %v1153 = vld [vmem:[%s1150 + $0x10] sm:$0xff]
        %v1154 = vld [vmem:[%s1150 + $0x18] sm:$0xff]
        %s1155 = scalar_lea.vmem %s2, 128
        %v1156 = vld [vmem:[%s1155] sm:$0xff]
        %v1157 = vld [vmem:[%s1155 + $0x8] sm:$0xff]
        %v1158 = vld [vmem:[%s1155 + $0x10] sm:$0xff]
        %v1159 = vld [vmem:[%s1155 + $0x18] sm:$0xff]
        %1161 = vset.pattern.permute.xlu0 0
        %1162 = vperm.xlu0 %1161, %v1156
        %v1163 = vpop.permute.xlu0 %1162
        %1166 = vset.pattern.permute.xlu0 0
        %1167 = vperm.xlu0 %1166, %v1157
        %v1168 = vpop.permute.xlu0 %1167
        %1171 = vset.pattern.permute.xlu0 0
        %1172 = vperm.xlu0 %1171, %v1158
        %v1173 = vpop.permute.xlu0 %1172
        %1176 = vset.pattern.permute.xlu0 0
        %1177 = vperm.xlu0 %1176, %v1159
        %v1178 = vpop.permute.xlu0 %1177
        %v1181 = vsel %vm235, %v1151, 0
        %v1184 = vsel %vm235, %v1152, 0
        %v1187 = vsel %vm235, %v1153, 0
        %v1190 = vsel %vm235, %v1154, 0
        %1192 = vmatprep.subr.mxu0 %v1135
        %1193 = vmatpush1.msra.mxu0 %v1134
        %1194 = vmatprep.subr.mxu0 %v1139
        %1195 = vmatpush1.msra.mxu0 %v1138
        %1196 = vmatprep.subr.mxu0 %v1143
        %1197 = vmatpush1.msra.mxu0 %v1142
        %1198 = vmatprep.subr.mxu0 %v1147
        %1199 = vmatpush1.msra.mxu0 %v1146
        %1200 = vmatprep.subr.mxu0 0.0
        %1201 = vmatpush1.msra.mxu0 0.0
        %1202 = vmatprep.subr.mxu0 0.0
        %1203 = vmatpush1.msra.mxu0 0.0
        %1204 = vmatprep.subr.mxu0 0.0
        %1205 = vmatpush1.msra.mxu0 0.0
        %1206 = vmatprep.subr.mxu0 0.0
        %1207 = vmatpush1.msra.mxu0 0.0
        %1208 = vmatprep.subr.mxu0 0.0
        %1209 = vmatpush1.msra.mxu0 0.0
        %1210 = vmatprep.subr.mxu0 0.0
        %1211 = vmatpush1.msra.mxu0 0.0
        %1212 = vmatprep.subr.mxu0 0.0
        %1213 = vmatpush1.msra.mxu0 0.0
        %1214 = vmatprep.subr.mxu0 0.0
        %1215 = vmatpush1.msra.mxu0 0.0
        %1216 = vmatprep.subr.mxu0 0.0
        %1217 = vmatpush1.msra.mxu0 0.0
        %1218 = vmatprep.subr.mxu0 0.0
        %1219 = vmatpush1.msra.mxu0 0.0
        %1220 = vmatprep.subr.mxu0 0.0
        %1221 = vmatpush1.msra.mxu0 0.0
        %1222 = vmatprep.subr.mxu0 0.0
        %1223 = vmatpush1.msra.mxu0 0.0
        %1224 = vmatprep.subr.mxu0 0.0
        %1225 = vmatpush1.msra.mxu0 0.0
        %1226 = vmatprep.subr.mxu0 0.0
        %1227 = vmatpush1.msra.mxu0 0.0
        %1228 = vmatprep.subr.mxu0 0.0
        %1229 = vmatpush1.msra.mxu0 0.0
        %1230 = vmatprep.subr.mxu0 0.0
        %1231 = vmatpush1.msra.mxu0 0.0
        %1232 = vmatprep.subr.mxu0 0.0
        %1233 = vmatpush1.msra.mxu0 0.0
        %1234 = vmatprep.subr.mxu0 0.0
        %1235 = vmatpush1.msra.mxu0 0.0
        %1236 = vmatprep.subr.mxu0 0.0
        %1237 = vmatpush1.msra.mxu0 0.0
        %1238 = vmatprep.subr.mxu0 0.0
        %1239 = vmatpush1.msra.mxu0 0.0
        %1240 = vmatprep.subr.mxu0 0.0
        %1241 = vmatpush1.msra.mxu0 0.0
        %1242 = vmatprep.subr.mxu0 0.0
        %1243 = vmatpush1.msra.mxu0 0.0
        %1244 = vmatprep.subr.mxu0 0.0
        %1245 = vmatpush1.msra.mxu0 0.0
        %1246 = vmatprep.subr.mxu0 0.0
        %1247 = vmatpush1.msra.mxu0 0.0
        %1248 = vmatprep.subr.mxu0 0.0
        %1249 = vmatpush1.msra.mxu0 0.0
        %1250 = vmatprep.subr.mxu0 0.0
        %1251 = vmatpush1.msra.mxu0 0.0
        %1252 = vmatprep.subr.mxu0 0.0
        %1253 = vmatpush1.msra.mxu0 0.0
        %1254 = vmatprep.subr.mxu0 0.0
        %1255 = vmatpush1.msra.mxu0 0.0
        %1256 = vmatprep.mubr.f32.mxu0 0.0
        %1257 = vmatmul.mubr.f32.gmra.mrb[0].mxu0 %v1181
        %v1258 = vpop.f32.mrb[0].mxu0
        %v1259 = vadd.f32 %v1163, %v1258
        %v1260 = vpop.f32.mrb[0].mxu0
        %v1261 = vadd.f32 %v1163, %v1260
        %1262 = vmatprep.mubr.f32.mxu0 0.0
        %1263 = vmatmul.mubr.f32.gmra.mrb[0].mxu0 %v1184
        %v1264 = vpop.f32.mrb[0].mxu0
        %v1265 = vadd.f32 %v1168, %v1264
        %v1266 = vpop.f32.mrb[0].mxu0
        %v1267 = vadd.f32 %v1168, %v1266
        %1268 = vmatprep.mubr.f32.mxu0 0.0
        %1269 = vmatmul.mubr.f32.gmra.mrb[0].mxu0 %v1187
        %v1270 = vpop.f32.mrb[0].mxu0
        %v1271 = vadd.f32 %v1173, %v1270
        %v1272 = vpop.f32.mrb[0].mxu0
        %v1273 = vadd.f32 %v1173, %v1272
        %1274 = vmatprep.mubr.f32.mxu0 0.0
        %1275 = vmatmul.mubr.f32.gmra.mrb[0].mxu0 %v1190
        %v1276 = vpop.f32.mrb[0].mxu0
        %v1277 = vadd.f32 %v1178, %v1276
        %v1278 = vpop.f32.mrb[0].mxu0
        %v1279 = vadd.f32 %v1178, %v1278
        %1280 = vdwg.mxu0
        %1281 = vmatprep.subr.mxu0 %v1137
        %1282 = vmatpush1.msra.mxu0 %v1136
        %1283 = vmatprep.subr.mxu0 %v1141
        %1284 = vmatpush1.msra.mxu0 %v1140
        %1285 = vmatprep.subr.mxu0 %v1145
        %1286 = vmatpush1.msra.mxu0 %v1144
        %1287 = vmatprep.subr.mxu0 %v1149
        %1288 = vmatpush1.msra.mxu0 %v1148
        %1289 = vmatprep.subr.mxu0 0.0
        %1290 = vmatpush1.msra.mxu0 0.0
        %1291 = vmatprep.subr.mxu0 0.0
        %1292 = vmatpush1.msra.mxu0 0.0
        %1293 = vmatprep.subr.mxu0 0.0
        %1294 = vmatpush1.msra.mxu0 0.0
        %1295 = vmatprep.subr.mxu0 0.0
        %1296 = vmatpush1.msra.mxu0 0.0
        %1297 = vmatprep.subr.mxu0 0.0
        %1298 = vmatpush1.msra.mxu0 0.0
        %1299 = vmatprep.subr.mxu0 0.0
        %1300 = vmatpush1.msra.mxu0 0.0
        %1301 = vmatprep.subr.mxu0 0.0
        %1302 = vmatpush1.msra.mxu0 0.0
        %1303 = vmatprep.subr.mxu0 0.0
        %1304 = vmatpush1.msra.mxu0 0.0
        %1305 = vmatprep.subr.mxu0 0.0
        %1306 = vmatpush1.msra.mxu0 0.0
        %1307 = vmatprep.subr.mxu0 0.0
        %1308 = vmatpush1.msra.mxu0 0.0
        %1309 = vmatprep.subr.mxu0 0.0
        %1310 = vmatpush1.msra.mxu0 0.0
        %1311 = vmatprep.subr.mxu0 0.0
        %1312 = vmatpush1.msra.mxu0 0.0
        %1313 = vmatprep.subr.mxu0 0.0
        %1314 = vmatpush1.msra.mxu0 0.0
        %1315 = vmatprep.subr.mxu0 0.0
        %1316 = vmatpush1.msra.mxu0 0.0
        %1317 = vmatprep.subr.mxu0 0.0
        %1318 = vmatpush1.msra.mxu0 0.0
        %1319 = vmatprep.subr.mxu0 0.0
        %1320 = vmatpush1.msra.mxu0 0.0
        %1321 = vmatprep.subr.mxu0 0.0
        %1322 = vmatpush1.msra.mxu0 0.0
        %1323 = vmatprep.subr.mxu0 0.0
        %1324 = vmatpush1.msra.mxu0 0.0
        %1325 = vmatprep.subr.mxu0 0.0
        %1326 = vmatpush1.msra.mxu0 0.0
        %1327 = vmatprep.subr.mxu0 0.0
        %1328 = vmatpush1.msra.mxu0 0.0
        %1329 = vmatprep.subr.mxu0 0.0
        %1330 = vmatpush1.msra.mxu0 0.0
        %1331 = vmatprep.subr.mxu0 0.0
        %1332 = vmatpush1.msra.mxu0 0.0
        %1333 = vmatprep.subr.mxu0 0.0
        %1334 = vmatpush1.msra.mxu0 0.0
        %1335 = vmatprep.subr.mxu0 0.0
        %1336 = vmatpush1.msra.mxu0 0.0
        %1337 = vmatprep.subr.mxu0 0.0
        %1338 = vmatpush1.msra.mxu0 0.0
        %1339 = vmatprep.subr.mxu0 0.0
        %1340 = vmatpush1.msra.mxu0 0.0
        %1341 = vmatprep.subr.mxu0 0.0
        %1342 = vmatpush1.msra.mxu0 0.0
        %1343 = vmatprep.subr.mxu0 0.0
        %1344 = vmatpush1.msra.mxu0 0.0
        %1345 = vmatprep.mubr.f32.mxu0 0.0
        %1346 = vmatmul.mubr.f32.gmra.mrb[0].mxu0 %v1181
        %v1347 = vpop.f32.mrb[0].mxu0
        %v1348 = vadd.f32 %v1163, %v1347
        %v1349 = vpop.f32.mrb[0].mxu0
        %v1350 = vadd.f32 %v1163, %v1349
        %1351 = vmatprep.mubr.f32.mxu0 0.0
        %1352 = vmatmul.mubr.f32.gmra.mrb[0].mxu0 %v1184
        %v1353 = vpop.f32.mrb[0].mxu0
        %v1354 = vadd.f32 %v1168, %v1353
        %v1355 = vpop.f32.mrb[0].mxu0
        %v1356 = vadd.f32 %v1168, %v1355
        %1357 = vmatprep.mubr.f32.mxu0 0.0
        %1358 = vmatmul.mubr.f32.gmra.mrb[0].mxu0 %v1187
        %v1359 = vpop.f32.mrb[0].mxu0
        %v1360 = vadd.f32 %v1173, %v1359
        %v1361 = vpop.f32.mrb[0].mxu0
        %v1362 = vadd.f32 %v1173, %v1361
        %1363 = vmatprep.mubr.f32.mxu0 0.0
        %1364 = vmatmul.mubr.f32.gmra.mrb[0].mxu0 %v1190
        %v1365 = vpop.f32.mrb[0].mxu0
        %v1366 = vadd.f32 %v1178, %v1365
        %v1367 = vpop.f32.mrb[0].mxu0
        %v1368 = vadd.f32 %v1178, %v1367
        %1369 = vdwg.mxu0
        %v1370 = vmax.f32 %v1259, 0.0
        %v1371 = vmax.f32 %v1261, 0.0
        %v1372 = vmax.f32 %v1348, 0.0
        %v1373 = vmax.f32 %v1350, 0.0
        %v1374 = vmax.f32 %v1265, 0.0
        %v1375 = vmax.f32 %v1267, 0.0
        %v1376 = vmax.f32 %v1354, 0.0
        %v1377 = vmax.f32 %v1356, 0.0
        %v1378 = vmax.f32 %v1271, 0.0
        %v1379 = vmax.f32 %v1273, 0.0
        %v1380 = vmax.f32 %v1360, 0.0
        %v1381 = vmax.f32 %v1362, 0.0
        %v1382 = vmax.f32 %v1277, 0.0
        %v1383 = vmax.f32 %v1279, 0.0
        %v1384 = vmax.f32 %v1366, 0.0
        %v1385 = vmax.f32 %v1368, 0.0
        %s1386 = scalar_lea.vmem %s1, 160
        %v1387 = vld [vmem:[%s1386] sm:$0xff]
        %v1388 = vld [vmem:[%s1386 + $0x8] sm:$0xff]
        %v1389 = vld [vmem:[%s1386 + $0x10] sm:$0xff]
        %v1390 = vld [vmem:[%s1386 + $0x18] sm:$0xff]
        %s1391 = scalar_lea.vmem %s2, 160
        %v1392 = vld [vmem:[%s1391] sm:$0xff]
        %v1393 = vld [vmem:[%s1391 + $0x8] sm:$0xff]
        %v1394 = vld [vmem:[%s1391 + $0x10] sm:$0xff]
        %v1395 = vld [vmem:[%s1391 + $0x18] sm:$0xff]
        %1397 = vset.pattern.permute.xlu0 0
        %1398 = vperm.xlu0 %1397, %v1392
        %v1399 = vpop.permute.xlu0 %1398
        %1402 = vset.pattern.permute.xlu0 0
        %1403 = vperm.xlu0 %1402, %v1393
        %v1404 = vpop.permute.xlu0 %1403
        %1407 = vset.pattern.permute.xlu0 0
        %1408 = vperm.xlu0 %1407, %v1394
        %v1409 = vpop.permute.xlu0 %1408
        %1411 = vset.pattern.permute.xlu0 0
        %1412 = vperm.xlu0 %1411, %v1395
        %v1413 = vpop.permute.xlu0 %1412
        %v1415 = vsel %vm235, %v1387, 0
        %v1418 = vsel %vm235, %v1388, 0
        %v1421 = vsel %vm235, %v1389, 0
        %v1424 = vsel %vm235, %v1390, 0
        %1426 = vmatprep.subr.mxu0 %v1371
        %1427 = vmatpush1.msra.mxu0 %v1370
        %1428 = vmatprep.subr.mxu0 %v1375
        %1429 = vmatpush1.msra.mxu0 %v1374
        %1430 = vmatprep.subr.mxu0 %v1379
        %1431 = vmatpush1.msra.mxu0 %v1378
        %1432 = vmatprep.subr.mxu0 %v1383
        %1433 = vmatpush1.msra.mxu0 %v1382
        %1434 = vmatprep.subr.mxu0 0.0
        %1435 = vmatpush1.msra.mxu0 0.0
        %1436 = vmatprep.subr.mxu0 0.0
        %1437 = vmatpush1.msra.mxu0 0.0
        %1438 = vmatprep.subr.mxu0 0.0
        %1439 = vmatpush1.msra.mxu0 0.0
        %1440 = vmatprep.subr.mxu0 0.0
        %1441 = vmatpush1.msra.mxu0 0.0
        %1442 = vmatprep.subr.mxu0 0.0
        %1443 = vmatpush1.msra.mxu0 0.0
        %1444 = vmatprep.subr.mxu0 0.0
        %1445 = vmatpush1.msra.mxu0 0.0
        %1446 = vmatprep.subr.mxu0 0.0
        %1447 = vmatpush1.msra.mxu0 0.0
        %1448 = vmatprep.subr.mxu0 0.0
        %1449 = vmatpush1.msra.mxu0 0.0
        %1450 = vmatprep.subr.mxu0 0.0
        %1451 = vmatpush1.msra.mxu0 0.0
        %1452 = vmatprep.subr.mxu0 0.0
        %1453 = vmatpush1.msra.mxu0 0.0
        %1454 = vmatprep.subr.mxu0 0.0
        %1455 = vmatpush1.msra.mxu0 0.0
        %1456 = vmatprep.subr.mxu0 0.0
        %1457 = vmatpush1.msra.mxu0 0.0
        %1458 = vmatprep.subr.mxu0 0.0
        %1459 = vmatpush1.msra.mxu0 0.0
        %1460 = vmatprep.subr.mxu0 0.0
        %1461 = vmatpush1.msra.mxu0 0.0
        %1462 = vmatprep.subr.mxu0 0.0
        %1463 = vmatpush1.msra.mxu0 0.0
        %1464 = vmatprep.subr.mxu0 0.0
        %1465 = vmatpush1.msra.mxu0 0.0
        %1466 = vmatprep.subr.mxu0 0.0
        %1467 = vmatpush1.msra.mxu0 0.0
        %1468 = vmatprep.subr.mxu0 0.0
        %1469 = vmatpush1.msra.mxu0 0.0
        %1470 = vmatprep.subr.mxu0 0.0
        %1471 = vmatpush1.msra.mxu0 0.0
        %1472 = vmatprep.subr.mxu0 0.0
        %1473 = vmatpush1.msra.mxu0 0.0
        %1474 = vmatprep.subr.mxu0 0.0
        %1475 = vmatpush1.msra.mxu0 0.0
        %1476 = vmatprep.subr.mxu0 0.0
        %1477 = vmatpush1.msra.mxu0 0.0
        %1478 = vmatprep.subr.mxu0 0.0
        %1479 = vmatpush1.msra.mxu0 0.0
        %1480 = vmatprep.subr.mxu0 0.0
        %1481 = vmatpush1.msra.mxu0 0.0
        %1482 = vmatprep.subr.mxu0 0.0
        %1483 = vmatpush1.msra.mxu0 0.0
        %1484 = vmatprep.subr.mxu0 0.0
        %1485 = vmatpush1.msra.mxu0 0.0
        %1486 = vmatprep.subr.mxu0 0.0
        %1487 = vmatpush1.msra.mxu0 0.0
        %1488 = vmatprep.subr.mxu0 0.0
        %1489 = vmatpush1.msra.mxu0 0.0
        %1490 = vmatprep.mubr.f32.mxu0 0.0
        %1491 = vmatmul.mubr.f32.gmra.mrb[0].mxu0 %v1415
        %v1492 = vpop.f32.mrb[0].mxu0
        %v1493 = vadd.f32 %v1399, %v1492
        %v1494 = vpop.f32.mrb[0].mxu0
        %v1495 = vadd.f32 %v1399, %v1494
        %1496 = vmatprep.mubr.f32.mxu0 0.0
        %1497 = vmatmul.mubr.f32.gmra.mrb[0].mxu0 %v1418
        %v1498 = vpop.f32.mrb[0].mxu0
        %v1499 = vadd.f32 %v1404, %v1498
        %v1500 = vpop.f32.mrb[0].mxu0
        %v1501 = vadd.f32 %v1404, %v1500
        %1502 = vmatprep.mubr.f32.mxu0 0.0
        %1503 = vmatmul.mubr.f32.gmra.mrb[0].mxu0 %v1421
        %v1504 = vpop.f32.mrb[0].mxu0
        %v1505 = vpop.f32.mrb[0].mxu0
        %1506 = vmatprep.mubr.f32.mxu0 0.0
        %1507 = vmatmul.mubr.f32.gmra.mrb[0].mxu0 %v1424
        %v1508 = vpop.f32.mrb[0].mxu0
        %v1509 = vpop.f32.mrb[0].mxu0
        %1510 = vdwg.mxu0
        %1511 = vmatprep.subr.mxu0 %v1373
        %1512 = vmatpush1.msra.mxu0 %v1372
        %1513 = vmatprep.subr.mxu0 %v1377
        %1514 = vmatpush1.msra.mxu0 %v1376
        %1515 = vmatprep.subr.mxu0 %v1381
        %1516 = vmatpush1.msra.mxu0 %v1380
        %1517 = vmatprep.subr.mxu0 %v1385
        %1518 = vmatpush1.msra.mxu0 %v1384
        %1519 = vmatprep.subr.mxu0 0.0
        %1520 = vmatpush1.msra.mxu0 0.0
        %1521 = vmatprep.subr.mxu0 0.0
        %1522 = vmatpush1.msra.mxu0 0.0
        %1523 = vmatprep.subr.mxu0 0.0
        %1524 = vmatpush1.msra.mxu0 0.0
        %1525 = vmatprep.subr.mxu0 0.0
        %1526 = vmatpush1.msra.mxu0 0.0
        %1527 = vmatprep.subr.mxu0 0.0
        %1528 = vmatpush1.msra.mxu0 0.0
        %1529 = vmatprep.subr.mxu0 0.0
        %1530 = vmatpush1.msra.mxu0 0.0
        %1531 = vmatprep.subr.mxu0 0.0
        %1532 = vmatpush1.msra.mxu0 0.0
        %1533 = vmatprep.subr.mxu0 0.0
        %1534 = vmatpush1.msra.mxu0 0.0
        %1535 = vmatprep.subr.mxu0 0.0
        %1536 = vmatpush1.msra.mxu0 0.0
        %1537 = vmatprep.subr.mxu0 0.0
        %1538 = vmatpush1.msra.mxu0 0.0
        %1539 = vmatprep.subr.mxu0 0.0
        %1540 = vmatpush1.msra.mxu0 0.0
        %1541 = vmatprep.subr.mxu0 0.0
        %1542 = vmatpush1.msra.mxu0 0.0
        %1543 = vmatprep.subr.mxu0 0.0
        %1544 = vmatpush1.msra.mxu0 0.0
        %1545 = vmatprep.subr.mxu0 0.0
        %1546 = vmatpush1.msra.mxu0 0.0
        %1547 = vmatprep.subr.mxu0 0.0
        %1548 = vmatpush1.msra.mxu0 0.0
        %1549 = vmatprep.subr.mxu0 0.0
        %1550 = vmatpush1.msra.mxu0 0.0
        %1551 = vmatprep.subr.mxu0 0.0
        %1552 = vmatpush1.msra.mxu0 0.0
        %1553 = vmatprep.subr.mxu0 0.0
        %1554 = vmatpush1.msra.mxu0 0.0
        %1555 = vmatprep.subr.mxu0 0.0
        %1556 = vmatpush1.msra.mxu0 0.0
        %1557 = vmatprep.subr.mxu0 0.0
        %1558 = vmatpush1.msra.mxu0 0.0
        %1559 = vmatprep.subr.mxu0 0.0
        %1560 = vmatpush1.msra.mxu0 0.0
        %1561 = vmatprep.subr.mxu0 0.0
        %1562 = vmatpush1.msra.mxu0 0.0
        %1563 = vmatprep.subr.mxu0 0.0
        %1564 = vmatpush1.msra.mxu0 0.0
        %1565 = vmatprep.subr.mxu0 0.0
        %1566 = vmatpush1.msra.mxu0 0.0
        %1567 = vmatprep.subr.mxu0 0.0
        %1568 = vmatpush1.msra.mxu0 0.0
        %1569 = vmatprep.subr.mxu0 0.0
        %1570 = vmatpush1.msra.mxu0 0.0
        %1571 = vmatprep.subr.mxu0 0.0
        %1572 = vmatpush1.msra.mxu0 0.0
        %1573 = vmatprep.subr.mxu0 0.0
        %1574 = vmatpush1.msra.mxu0 0.0
        %1575 = vmatprep.mubr.f32.mxu0 0.0
        %1576 = vmatmul.mubr.f32.gmra.mrb[0].mxu0 %v1415
        %v1577 = vpop.f32.mrb[0].mxu0
        %v1578 = vadd.f32 %v1399, %v1577
        %v1579 = vpop.f32.mrb[0].mxu0
        %v1580 = vadd.f32 %v1399, %v1579
        %1581 = vmatprep.mubr.f32.mxu0 0.0
        %1582 = vmatmul.mubr.f32.gmra.mrb[0].mxu0 %v1418
        %v1583 = vpop.f32.mrb[0].mxu0
        %v1584 = vadd.f32 %v1404, %v1583
        %v1585 = vpop.f32.mrb[0].mxu0
        %v1586 = vadd.f32 %v1404, %v1585
        %1587 = vmatprep.mubr.f32.mxu0 0.0
        %1588 = vmatmul.mubr.f32.gmra.mrb[0].mxu0 %v1421
        %v1589 = vpop.f32.mrb[0].mxu0
        %v1590 = vpop.f32.mrb[0].mxu0
        %1591 = vmatprep.mubr.f32.mxu0 0.0
        %1592 = vmatmul.mubr.f32.gmra.mrb[0].mxu0 %v1424
        %v1593 = vpop.f32.mrb[0].mxu0
        %v1594 = vpop.f32.mrb[0].mxu0
        %1595 = vdwg.mxu0
        %v1596 = vand.u32 2147483647, %v1493
        %v1597 = vand.u32 2147483647, %v1495
        %v1598 = vand.u32 2147483647, %v1578
        %v1599 = vand.u32 2147483647, %v1580
        %v1600 = vand.u32 2147483647, %v1499
        %v1601 = vand.u32 2147483647, %v1501
        %v1602 = vand.u32 2147483647, %v1584
        %v1603 = vand.u32 2147483647, %v1586
        %v1604 = vsub.f32 0.0, %v1596
        %v1605 = vsub.f32 0.0, %v1597
        %v1606 = vsub.f32 0.0, %v1598
        %v1607 = vsub.f32 0.0, %v1599
        %v1608 = vsub.f32 0.0, %v1600
        %v1609 = vsub.f32 0.0, %v1601
        %v1610 = vsub.f32 0.0, %v1602
        %v1611 = vsub.f32 0.0, %v1603
        %v1612 = vmul.f32 %v1604, 1.442695
        %v1613 = vpow.pop %v1612
        %v1614 = vmul.f32 %v1605, 1.442695
        %v1615 = vpow.pop %v1614
        %v1616 = vmul.f32 %v1606, 1.442695
        %v1617 = vpow.pop %v1616
        %v1618 = vmul.f32 %v1607, 1.442695
        %v1619 = vpow.pop %v1618
        %v1620 = vmul.f32 %v1608, 1.442695
        %v1621 = vpow.pop %v1620
        %v1622 = vmul.f32 %v1609, 1.442695
        %v1623 = vpow.pop %v1622
        %v1624 = vmul.f32 %v1610, 1.442695
        %v1625 = vpow.pop %v1624
        %v1626 = vmul.f32 %v1611, 1.442695
        %v1627 = vpow.pop %v1626
        %vm1628 = vcmp.ge.f32.partialorder %v1493, 0.0
        %vm1629 = vcmp.ge.f32.partialorder %v1495, 0.0
        %vm1630 = vcmp.ge.f32.partialorder %v1578, 0.0
        %vm1631 = vcmp.ge.f32.partialorder %v1580, 0.0
        %vm1632 = vcmp.ge.f32.partialorder %v1499, 0.0
        %vm1633 = vcmp.ge.f32.partialorder %v1501, 0.0
        %vm1634 = vcmp.ge.f32.partialorder %v1584, 0.0
        %vm1635 = vcmp.ge.f32.partialorder %v1586, 0.0
        %v1636 = vsel %vm1628, 1.0, %v1613
        %v1637 = vsel %vm1629, 1.0, %v1615
        %v1638 = vsel %vm1630, 1.0, %v1617
        %v1639 = vsel %vm1631, 1.0, %v1619
        %v1640 = vsel %vm1632, 1.0, %v1621
        %v1641 = vsel %vm1633, 1.0, %v1623
        %v1642 = vsel %vm1634, 1.0, %v1625
        %v1643 = vsel %vm1635, 1.0, %v1627
        %v1644 = vadd.f32 %v1613, 1.0
        %v1645 = vadd.f32 %v1615, 1.0
        %v1646 = vadd.f32 %v1617, 1.0
        %v1647 = vadd.f32 %v1619, 1.0
        %v1648 = vadd.f32 %v1621, 1.0
        %v1649 = vadd.f32 %v1623, 1.0
        %v1650 = vadd.f32 %v1625, 1.0
        %v1651 = vadd.f32 %v1627, 1.0
        %v1652 = vrcp.pop %v1644
        %v1653 = vrcp.pop %v1645
        %v1654 = vrcp.pop %v1646
        %v1655 = vrcp.pop %v1647
        %v1656 = vrcp.pop %v1648
        %v1657 = vrcp.pop %v1649
        %v1658 = vrcp.pop %v1650
        %v1659 = vrcp.pop %v1651
        %v1660 = vmul.f32 %v1636, %v1652
        %v1661 = vmul.f32 %v1637, %v1653
        %v1662 = vmul.f32 %v1638, %v1654
        %v1663 = vmul.f32 %v1639, %v1655
        %v1664 = vmul.f32 %v1640, %v1656
        %v1665 = vmul.f32 %v1641, %v1657
        %v1666 = vmul.f32 %v1642, %v1658
        %v1667 = vmul.f32 %v1643, %v1659
        %v1668 = vadd.f32 %v1660, %v1664
        %v1669 = vrot.slane %v1668, 4
        %v1670 = vadd.f32 %v1668, %v1669
        %v1671 = vrot.slane %v1670, 2
        %v1672 = vadd.f32 %v1670, %v1671
        %v1673 = vrot.slane %v1672, 1
        %v1674 = vadd.f32 %v1672, %v1673
        %v1675 = vadd.f32 %v1661, %v1665
        %v1676 = vrot.slane %v1675, 4
        %v1677 = vadd.f32 %v1675, %v1676
        %v1678 = vrot.slane %v1677, 2
        %v1679 = vadd.f32 %v1677, %v1678
        %v1680 = vrot.slane %v1679, 1
        %v1681 = vadd.f32 %v1679, %v1680
        %v1682 = vadd.f32 %v1662, %v1666
        %v1683 = vrot.slane %v1682, 4
        %v1684 = vadd.f32 %v1682, %v1683
        %v1685 = vrot.slane %v1684, 2
        %v1686 = vadd.f32 %v1684, %v1685
        %v1687 = vrot.slane %v1686, 1
        %v1688 = vadd.f32 %v1686, %v1687
        %v1689 = vadd.f32 %v1663, %v1667
        %v1690 = vrot.slane %v1689, 4
        %v1691 = vadd.f32 %v1689, %v1690
        %v1692 = vrot.slane %v1691, 2
        %v1693 = vadd.f32 %v1691, %v1692
        %v1694 = vrot.slane %v1693, 1
        %v1695 = vadd.f32 %v1693, %v1694
        %v1696 = vmax.f32 %v1674, 1e-12
        %v1697 = vmax.f32 %v1681, 1e-12
        %v1698 = vmax.f32 %v1688, 1e-12
        %v1699 = vmax.f32 %v1695, 1e-12
        %v1700 = vrcp.pop %v1696
        %v1701 = vmul.f32 %v1660, %v1700
        %v1702 = vrcp.pop %v1697
        %v1703 = vmul.f32 %v1661, %v1702
        %v1704 = vrcp.pop %v1698
        %v1705 = vmul.f32 %v1662, %v1704
        %v1706 = vrcp.pop %v1699
        %v1707 = vmul.f32 %v1663, %v1706
        %v1708 = vmul.f32 %v1664, %v1700
        %v1709 = vmul.f32 %v1665, %v1702
        %v1710 = vmul.f32 %v1666, %v1704
        %v1711 = vmul.f32 %v1667, %v1706
        %1712 = vst [vmem:[%s188] sm:$0xff] %v1701
        %1713 = vst [vmem:[%s188 + $0x8] sm:$0xff] %v1703
        %1714 = vst [vmem:[%s188 + $0x10] sm:$0xff] %v1705
        %1715 = vst [vmem:[%s188 + $0x18] sm:$0xff] %v1707
        %1716 = vst [vmem:[%s188 + $0x20] sm:$0xff] %v1708
        %1717 = vst [vmem:[%s188 + $0x28] sm:$0xff] %v1709
        %1718 = vst [vmem:[%s188 + $0x30] sm:$0xff] %v1710
        %1719 = vst [vmem:[%s188 + $0x38] sm:$0xff] %v1711
        %s1720 = sand.u32 %s96, 1
        %s1721 = scalar_lea.sflag [#allocation4], %s1720
        %s1722 = sand.u32 %s96, 1
        %s1723 = smul.addr %s1722, 64
        %s1724 = scalar_lea.vmem [#allocation5], %s1723
        // Predicated region
        $region37: #{tpu_custom_call.1} parent=31 // pred_check
          %p1725 = pneg %p106
        $region38: #{tpu_custom_call.1} parent=31 // pred_check_branch
          %1727 = sbr.rel (%p1725) target = $region40
        $region39: #{tpu_custom_call.1} parent=31 // pred_region
          %s1728 = smul.u32 4, %s20
          %s1730 = ssub.s32 1024, 1024
          %1731 = vsyncadd %s1721, %s1730
          %s1732 = smul.addr %s1728, 128
          %s1733 = scalar_lea.hbm %s3, %s1732
          %s1734 = sshll.u32 %s1724, 4
          %s1735 = int_to_ptr.vmem [resolvable:$true] %s1734
          %1740 = dma.vmem_to_hbm [thread:$0]  %s1735, 1024, %s1733, %s1721, 512, 1024, 32
        $region40: #{tpu_custom_call.1} parent=31 // pred_fallthru
          _
      $region32: #{tpu_custom_call.1} parent=5 // pred_fallthru
        _
      %p1741 = scmp.le.s32.totalorder 2, %s15
      // Predicated region
      $region41: #{tpu_custom_call.1} parent=5 // pred_check
        %p1742 = pneg %p1741
      $region42: #{tpu_custom_call.1} parent=5 // pred_check_branch
        %1744 = sbr.rel (%p1742) target = $region44
      $region43: #{tpu_custom_call.1} parent=5 // pred_region
        %s1745 = ssub.s32 %s15, 2
        // Predicated region
        $region45: #{tpu_custom_call.1} parent=43 // pred_check
          %p1746 = pneg %p112
        $region46: #{tpu_custom_call.1} parent=43 // pred_check_branch
          %1748 = sbr.rel (%p1746) target = $region48
        $region47: #{tpu_custom_call.1} parent=43 // pred_region
          %s1749 = sand.u32 %s97, 1
          %s1750 = scalar_lea.sflag [#allocation4], %s1749
          %s1751 = sand.u32 %s97, 1
          %s1752 = smul.addr %s1751, 64
          %s1753 = scalar_lea.vmem [#allocation5], %s1752
          %1754 = dma.done %s1750, 1024
        $region48: #{tpu_custom_call.1} parent=43 // pred_fallthru
          _
      $region44: #{tpu_custom_call.1} parent=5 // pred_fallthru
        _
    $region6: #{tpu_custom_call.1} parent=1 // loop_footer
      %s19 = sadd.s32 1, %s15
    $region7: #{tpu_custom_call.1} parent=1 // loop_footer_branch
      %14 = sbr.rel target = $region3
    $region8: #{tpu_custom_call.1} parent=1 // loop_exit
      _
    %1755 = vsyncpa [#allocation3], 1
    %s1756 = scalar_lea.sflag [#allocation3], 1
    %1757 = vsyncpa %s1756, 1
    %1758 = vsyncpa [#allocation4], 1
    %s1759 = scalar_lea.sflag [#allocation4], 1
    %1760 = vsyncpa %s1759, 1

</llo_original>
